<compile_context>
chip_gen: v7x
topology: tpu7x:2x2x1
jax: 0.10.0
libtpu: 0.0.40
codegen_flags: <defaults>
</compile_context>

<pallas_src>
import math

import jax
import jax.numpy as jnp
from jax.experimental import pallas as pl
from jax.experimental.pallas import tpu as pltpu


def mhsa_kernel(x_ref, mask_ref, wqkv_ref, bqkv_ref, bo_ref, out_ref):
    # x_ref:    (Bblk*L, D)          mask_ref: (Bblk, L)  (nonzero = keep, 0 = masked)
    # wqkv_ref: (D, 3*H*D)  columns = [Wq^T/sqrt(D) | Wk^T | Wv^T @ Wo^T per head]
    # bqkv_ref: (1, 3*H*D)  rows    = [bq/sqrt(D)   | bk   | bv_h @ Wo_h per head]
    # bo_ref:   (1, D)      final output bias only
    Bblk, L = mask_ref.shape
    D = x_ref.shape[-1]
    HD = wqkv_ref.shape[-1] // 3
    H = HD // D

    x = x_ref[...]                                     # (Bblk*L, D)

    # Fused Q/K/V' projection: single MXU pass (N = 3*H*D).
    qkv = jnp.dot(x, wqkv_ref[...], preferred_element_type=jnp.float32) + bqkv_ref[...]
    qs = qkv[:, :HD]                 # already scaled by 1/sqrt(d_k) via the weights
    ks = qkv[:, HD:2 * HD]
    vs = qkv[:, 2 * HD:]             # values pre-projected by the output weight Wo

    # Additive key-mask bias, computed once per grid step (not per head/batch).
    mbias = jnp.where(mask_ref[...] == 0, -10000.0, 0.0)   # (Bblk, L) float32
    bo = bo_ref[...]                                        # (1, D)

    out_rows = []
    for bi in range(Bblk):                             # static, fully unrolled
        rows = slice(bi * L, (bi + 1) * L)
        bias_b = mbias[bi:bi + 1, :]                   # (1, L), broadcast over queries
        acc = jnp.zeros((L, D), jnp.float32)
        for h in range(H):                             # static, fully unrolled
            cols = slice(h * D, (h + 1) * D)
            qh = qs[rows, cols]
            kh = ks[rows, cols]
            vh = vs[rows, cols]
            # q @ k^T without materializing a transpose of the key tile.
            score = jax.lax.dot_general(
                qh, kh, (((1,), (1,)), ((), ())),
                preferred_element_type=jnp.float32) + bias_b
            m = jnp.max(score, axis=-1, keepdims=True)
            e = jnp.exp(score - m)
            denom = jnp.sum(e, axis=-1, keepdims=True)
            p = e * pl.reciprocal(denom, approx=True)  # EUP, not a VALU divide
            # Output projection already folded into vh -> context never leaves vregs
            # and no per-head (L,D)@(D,D) matmul is needed.
            acc = acc + jnp.dot(p, vh, preferred_element_type=jnp.float32)
        out_rows.append(acc + bo)

    out = jnp.concatenate(out_rows, axis=0)            # sublane-aligned concat
    out_ref[...] = out.astype(out_ref.dtype)


def prepare_params(params):
    """One-time weight layout prep / fusion (hoisted out of the hot call path)."""
    HD, D = params["wq"].shape                         # torch Linear weight: (H*D, D)
    H = HD // D
    scale = 1.0 / math.sqrt(D)

    wq_t = params["wq"].T * scale                      # (D, H*D), 1/sqrt(d_k) folded in
    wk_t = params["wk"].T                              # (D, H*D)

    # Fold the output projection into the value projection, per head:
    #   ctx_h @ Wo_h == p_h @ (x @ (Wv_h^T @ Wo_h) + bv_h @ Wo_h)
    wv_h = params["wv"].reshape(H, D, D)               # [h, d_head, d_in]
    wo_h = params["wo"].T.reshape(H, D, D)             # [h, d_head, d_out]
    w_vo = jnp.einsum("hki,hko->iho", wv_h, wo_h).reshape(D, HD)          # (D, H*D)
    b_vo = jnp.einsum("hk,hko->ho", params["bv"].reshape(H, D), wo_h).reshape(HD)

    w_qkv = jnp.concatenate([wq_t, wk_t, w_vo], axis=1)                   # (D, 3*H*D)
    b_qkv = jnp.concatenate(
        [params["bq"] * scale, params["bk"], b_vo]).reshape(1, 3 * HD)
    return {
        "w_qkv": w_qkv,
        "b_qkv": b_qkv,
        "bo": params["bo"].reshape(1, D),
    }


def multi_head_self_attention(Q, attention_masks, prepared, K=None, V=None,
                              block_batch=None):
    """Pallas forward pass of MultiHeadSelfAttention (self-attention path)."""
    if K is not None or V is not None:
        # TODO(synk): distinct K/V (cross-attention) is not covered by the fused
        # QKV kernel; the PyTorch module's default forward path is self-attention.
        raise NotImplementedError("fused Pallas kernel implements self-attention only")

    B, L, D = Q.shape
    HD3 = prepared["w_qkv"].shape[1]

    # Block several batch elements per grid step so each step feeds the MXU with
    # Bblk*L rows and the per-step pipeline overhead is amortized.
    if block_batch is None:
        block_batch = 1
        for cand in range(1, B + 1):
            if B % cand == 0 and cand * L <= 512:
                block_batch = cand
    assert B % block_batch == 0
    grid = (B // block_batch,)

    x2d = Q.reshape(B * L, D)                          # metadata-only reshape
    mask = attention_masks.astype(jnp.int32)
    full2d = lambda shape: pl.BlockSpec(shape, lambda b: (0, 0))

    out2d = pl.pallas_call(
        mhsa_kernel,
        out_shape=jax.ShapeDtypeStruct((B * L, D), Q.dtype),
        grid_spec=pltpu.PrefetchScalarGridSpec(
            num_scalar_prefetch=0,
            grid=grid,
            in_specs=[
                pl.BlockSpec((block_batch * L, D), lambda b: (b, 0)),   # x (=Q=K=V)
                pl.BlockSpec((block_batch, L), lambda b: (b, 0)),       # key mask
                full2d((D, HD3)), full2d((1, HD3)),                     # fused W, b
                full2d((1, D)),                                         # output bias
            ],
            out_specs=pl.BlockSpec((block_batch * L, D), lambda b: (b, 0)),
        ),
        compiler_params=pltpu.CompilerParams(
            # Batch blocks are independent -> shardable across v7x's 2 TensorCores.
            dimension_semantics=("parallel",)),
    )(x2d, mask, prepared["w_qkv"], prepared["b_qkv"], prepared["bo"])
    return out2d.reshape(B, L, D)


def reference_mhsa(Q, attention_masks, params, K=None, V=None):
    """Pure-JAX reference mirroring the PyTorch module exactly."""
    if K is None:
        K = Q
    if V is None:
        V = Q
    B, L, D = Q.shape
    HD = params["wq"].shape[0]
    H = HD // D

    def lin(x, w, b):
        return jnp.einsum("bld,nd->bln", x, w) + b

    qs = lin(Q, params["wq"], params["bq"]).reshape(B, L, H, D).transpose(0, 2, 1, 3)
    ks = lin(K, params["wk"], params["bk"]).reshape(B, L, H, D).transpose(0, 2, 1, 3)
    vs = lin(V, params["wv"], params["bv"]).reshape(B, L, H, D).transpose(0, 2, 1, 3)

    score = jnp.einsum("bhqd,bhkd->bhqk", qs, ks) / math.sqrt(D)
    mask = attention_masks[:, None, None, :]                      # (B,1,1,L)
    score = jnp.where(mask == 0, -10000.0, score)
    score = jax.nn.softmax(score, axis=-1)
    ctx = jnp.einsum("bhqk,bhkd->bhqd", score, vs)
    ctx = ctx.transpose(0, 2, 1, 3).reshape(B, L, H * D)
    return jnp.einsum("bln,dn->bld", ctx, params["wo"]) + params["bo"]


def init_params(key, d_model, num_heads):
    """Deterministic PyTorch-style (uniform +-1/sqrt(fan_in)) Linear init."""
    HD = d_model * num_heads
    keys = jax.random.split(key, 8)

    def lin_init(kw, kb, fan_in, fan_out):
        lim = 1.0 / math.sqrt(fan_in)
        w = jax.random.uniform(kw, (fan_out, fan_in), jnp.float32, -lim, lim)
        b = jax.random.uniform(kb, (fan_out,), jnp.float32, -lim, lim)
        return w, b

    wq, bq = lin_init(keys[0], keys[1], d_model, HD)
    wk, bk = lin_init(keys[2], keys[3], d_model, HD)
    wv, bv = lin_init(keys[4], keys[5], d_model, HD)
    wo, bo = lin_init(keys[6], keys[7], HD, d_model)
    return dict(wq=wq, bq=bq, wk=wk, bk=bk, wv=wv, bv=bv, wo=wo, bo=bo,
                num_heads=num_heads)


if __name__ == "__main__":
    # Small shapes consistent with the module: batch=2, seq=8, d_model=32, heads=4
    B, L, D, H = 2, 8, 32, 4
    key = jax.random.PRNGKey(0)
    k_q, k_m, k_p = jax.random.split(key, 3)

    Q = jax.random.normal(k_q, (B, L, D), dtype=jnp.float32)
    attention_masks = (jax.random.uniform(k_m, (B, L)) > 0.25).astype(jnp.int32)
    params = init_params(k_p, D, H)

    # One-time layout prep (fused / transposed / Wo-folded weights) — not hot path.
    prepared = prepare_params(params)
    prepared = jax.tree_util.tree_map(jax.block_until_ready, prepared)

    # NOTE: self.dropout is defined in __init__ but never applied in forward,
    # so no dropout is implemented here (matching forward semantics exactly).
    out = multi_head_self_attention(Q, attention_masks, prepared)
    out = jax.block_until_ready(out)

    ref = reference_mhsa(Q, attention_masks, params)
    assert out.shape == (B, L, D)
    # approx reciprocal (EUP) in the softmax -> slightly looser tolerance than exact divide
    assert jnp.allclose(out, ref, atol=2e-3, rtol=2e-3), "mismatch vs reference"

    print("KERNEL_OK")
</pallas_src>

<mosaic_0001>
module attributes {stable_mosaic.version = 11 : i64} {
  func.func @mhsa_kernel(%arg0: i32, %arg1: memref<16x32xf32, #tpu.memory_space<vmem>>, %arg2: memref<2x8xi32, #tpu.memory_space<vmem>>, %arg3: memref<32x384xf32, #tpu.memory_space<vmem>>, %arg4: memref<1x384xf32, #tpu.memory_space<vmem>>, %arg5: memref<1x32xf32, #tpu.memory_space<vmem>>, %arg6: memref<16x32xf32, #tpu.memory_space<vmem>>) attributes {dimension_semantics = [#tpu.dimension_semantics<parallel>], iteration_bounds = array<i64: 1>, scalar_prefetch = 0 : i64, scratch_operands = 0 : i64, tpu.core_type = #tpu.core_type<tc>, window_params = [{transform_indices = @transform_0, window_bounds = array<i64: 16, 32>}, {transform_indices = @transform_1, window_bounds = array<i64: 2, 8>}, {pipeline_mode = #tpu.pipeline_mode<synchronous>, transform_indices = @transform_2, window_bounds = array<i64: 32, 384>}, {pipeline_mode = #tpu.pipeline_mode<synchronous>, transform_indices = @transform_3, window_bounds = array<i64: 1, 384>}, {pipeline_mode = #tpu.pipeline_mode<synchronous>, transform_indices = @transform_4, window_bounds = array<i64: 1, 32>}, {transform_indices = @transform_5, window_bounds = array<i64: 16, 32>}]} {
    %c0 = arith.constant 0 : index
    %c0_0 = arith.constant 0 : index
    %0 = vector.load %arg1[%c0, %c0_0] : memref<16x32xf32, #tpu.memory_space<vmem>>, vector<16x32xf32>
    %c0_1 = arith.constant 0 : index
    %c0_2 = arith.constant 0 : index
    %1 = vector.load %arg3[%c0_1, %c0_2] : memref<32x384xf32, #tpu.memory_space<vmem>>, vector<32x384xf32>
    %cst = arith.constant dense<0.000000e+00> : vector<16x384xf32>
    %2 = tpu.matmul %0, %1, %cst {dimension_numbers = #tpu.dot_dimension_numbers<[1], [0], [0], [1], [0, 0, 1, 1], [], []>} : vector<16x32xf32>, vector<32x384xf32>, vector<16x384xf32> -> vector<16x384xf32>
    %c0_3 = arith.constant 0 : index
    %c0_4 = arith.constant 0 : index
    %3 = vector.load %arg4[%c0_3, %c0_4] : memref<1x384xf32, #tpu.memory_space<vmem>>, vector<1x384xf32>
    %4 = vector.broadcast %3 : vector<1x384xf32> to vector<16x384xf32>
    %5 = arith.addf %2, %4 : vector<16x384xf32>
    %6 = vector.extract_strided_slice %5 {offsets = [0, 0], sizes = [16, 128], strides = [1, 1]} : vector<16x384xf32> to vector<16x128xf32>
    %7 = vector.extract_strided_slice %5 {offsets = [0, 128], sizes = [16, 128], strides = [1, 1]} : vector<16x384xf32> to vector<16x128xf32>
    %8 = vector.extract_strided_slice %5 {offsets = [0, 256], sizes = [16, 128], strides = [1, 1]} : vector<16x384xf32> to vector<16x128xf32>
    %c0_5 = arith.constant 0 : index
    %c0_6 = arith.constant 0 : index
    %9 = vector.load %arg2[%c0_5, %c0_6] : memref<2x8xi32, #tpu.memory_space<vmem>>, vector<2x8xi32>
    %c0_i32 = arith.constant 0 : i32
    %10 = vector.broadcast %c0_i32 : i32 to vector<2x8xi32>
    %11 = arith.cmpi eq, %9, %10 : vector<2x8xi32>
    %cst_7 = arith.constant -1.000000e+04 : f32
    %cst_8 = arith.constant 0.000000e+00 : f32
    %12 = vector.broadcast %cst_7 : f32 to vector<2x8xf32>
    %13 = vector.broadcast %cst_8 : f32 to vector<2x8xf32>
    %14 = arith.select %11, %12, %13 : vector<2x8xi1>, vector<2x8xf32>
    %c0_9 = arith.constant 0 : index
    %c0_10 = arith.constant 0 : index
    %15 = vector.load %arg5[%c0_9, %c0_10] : memref<1x32xf32, #tpu.memory_space<vmem>>, vector<1x32xf32>
    %16 = vector.extract_strided_slice %14 {offsets = [0, 0], sizes = [1, 8], strides = [1, 1]} : vector<2x8xf32> to vector<1x8xf32>
    %cst_11 = arith.constant 0.000000e+00 : f32
    %17 = vector.broadcast %cst_11 : f32 to vector<8x32xf32>
    %18 = vector.extract_strided_slice %6 {offsets = [0, 0], sizes = [8, 32], strides = [1, 1]} : vector<16x128xf32> to vector<8x32xf32>
    %19 = vector.extract_strided_slice %7 {offsets = [0, 0], sizes = [8, 32], strides = [1, 1]} : vector<16x128xf32> to vector<8x32xf32>
    %20 = vector.extract_strided_slice %8 {offsets = [0, 0], sizes = [8, 32], strides = [1, 1]} : vector<16x128xf32> to vector<8x32xf32>
    %cst_12 = arith.constant dense<0.000000e+00> : vector<8x8xf32>
    %21 = tpu.matmul %18, %19, %cst_12 {dimension_numbers = #tpu.dot_dimension_numbers<[1], [1], [0], [0], [0, 0, 1, 0], [], []>} : vector<8x32xf32>, vector<8x32xf32>, vector<8x8xf32> -> vector<8x8xf32>
    %22 = vector.broadcast %16 : vector<1x8xf32> to vector<8x8xf32>
    %23 = arith.addf %21, %22 : vector<8x8xf32>
    %cst_13 = arith.constant dense<0xFF800000> : vector<8xf32>
    %24 = vector.multi_reduction <maximumf>, %23, %cst_13 [1] : vector<8x8xf32> to vector<8xf32>
    %25 = vector.shape_cast %24 : vector<8xf32> to vector<8x1xf32>
    %26 = vector.broadcast %25 : vector<8x1xf32> to vector<8x8xf32>
    %27 = arith.subf %23, %26 : vector<8x8xf32>
    %28 = math.exp %27 : vector<8x8xf32>
    %cst_14 = arith.constant dense<0.000000e+00> : vector<8xf32>
    %29 = vector.multi_reduction <add>, %28, %cst_14 [1] : vector<8x8xf32> to vector<8xf32>
    %30 = vector.shape_cast %29 : vector<8xf32> to vector<8x1xf32>
    %31 = tpu.reciprocal %30 {approx = true} : vector<8x1xf32> -> vector<8x1xf32>
    %32 = vector.broadcast %31 : vector<8x1xf32> to vector<8x8xf32>
    %33 = arith.mulf %28, %32 : vector<8x8xf32>
    %cst_15 = arith.constant dense<0.000000e+00> : vector<8x32xf32>
    %34 = tpu.matmul %33, %20, %cst_15 {dimension_numbers = #tpu.dot_dimension_numbers<[1], [0], [0], [1], [0, 0, 1, 1], [], []>} : vector<8x8xf32>, vector<8x32xf32>, vector<8x32xf32> -> vector<8x32xf32>
    %35 = arith.addf %17, %34 : vector<8x32xf32>
    %36 = vector.extract_strided_slice %6 {offsets = [0, 32], sizes = [8, 32], strides = [1, 1]} : vector<16x128xf32> to vector<8x32xf32>
    %37 = vector.extract_strided_slice %7 {offsets = [0, 32], sizes = [8, 32], strides = [1, 1]} : vector<16x128xf32> to vector<8x32xf32>
    %38 = vector.extract_strided_slice %8 {offsets = [0, 32], sizes = [8, 32], strides = [1, 1]} : vector<16x128xf32> to vector<8x32xf32>
    %cst_16 = arith.constant dense<0.000000e+00> : vector<8x8xf32>
    %39 = tpu.matmul %36, %37, %cst_16 {dimension_numbers = #tpu.dot_dimension_numbers<[1], [1], [0], [0], [0, 0, 1, 0], [], []>} : vector<8x32xf32>, vector<8x32xf32>, vector<8x8xf32> -> vector<8x8xf32>
    %40 = vector.broadcast %16 : vector<1x8xf32> to vector<8x8xf32>
    %41 = arith.addf %39, %40 : vector<8x8xf32>
    %cst_17 = arith.constant dense<0xFF800000> : vector<8xf32>
    %42 = vector.multi_reduction <maximumf>, %41, %cst_17 [1] : vector<8x8xf32> to vector<8xf32>
    %43 = vector.shape_cast %42 : vector<8xf32> to vector<8x1xf32>
    %44 = vector.broadcast %43 : vector<8x1xf32> to vector<8x8xf32>
    %45 = arith.subf %41, %44 : vector<8x8xf32>
    %46 = math.exp %45 : vector<8x8xf32>
    %cst_18 = arith.constant dense<0.000000e+00> : vector<8xf32>
    %47 = vector.multi_reduction <add>, %46, %cst_18 [1] : vector<8x8xf32> to vector<8xf32>
    %48 = vector.shape_cast %47 : vector<8xf32> to vector<8x1xf32>
    %49 = tpu.reciprocal %48 {approx = true} : vector<8x1xf32> -> vector<8x1xf32>
    %50 = vector.broadcast %49 : vector<8x1xf32> to vector<8x8xf32>
    %51 = arith.mulf %46, %50 : vector<8x8xf32>
    %cst_19 = arith.constant dense<0.000000e+00> : vector<8x32xf32>
    %52 = tpu.matmul %51, %38, %cst_19 {dimension_numbers = #tpu.dot_dimension_numbers<[1], [0], [0], [1], [0, 0, 1, 1], [], []>} : vector<8x8xf32>, vector<8x32xf32>, vector<8x32xf32> -> vector<8x32xf32>
    %53 = arith.addf %35, %52 : vector<8x32xf32>
    %54 = vector.extract_strided_slice %6 {offsets = [0, 64], sizes = [8, 32], strides = [1, 1]} : vector<16x128xf32> to vector<8x32xf32>
    %55 = vector.extract_strided_slice %7 {offsets = [0, 64], sizes = [8, 32], strides = [1, 1]} : vector<16x128xf32> to vector<8x32xf32>
    %56 = vector.extract_strided_slice %8 {offsets = [0, 64], sizes = [8, 32], strides = [1, 1]} : vector<16x128xf32> to vector<8x32xf32>
    %cst_20 = arith.constant dense<0.000000e+00> : vector<8x8xf32>
    %57 = tpu.matmul %54, %55, %cst_20 {dimension_numbers = #tpu.dot_dimension_numbers<[1], [1], [0], [0], [0, 0, 1, 0], [], []>} : vector<8x32xf32>, vector<8x32xf32>, vector<8x8xf32> -> vector<8x8xf32>
    %58 = vector.broadcast %16 : vector<1x8xf32> to vector<8x8xf32>
    %59 = arith.addf %57, %58 : vector<8x8xf32>
    %cst_21 = arith.constant dense<0xFF800000> : vector<8xf32>
    %60 = vector.multi_reduction <maximumf>, %59, %cst_21 [1] : vector<8x8xf32> to vector<8xf32>
    %61 = vector.shape_cast %60 : vector<8xf32> to vector<8x1xf32>
    %62 = vector.broadcast %61 : vector<8x1xf32> to vector<8x8xf32>
    %63 = arith.subf %59, %62 : vector<8x8xf32>
    %64 = math.exp %63 : vector<8x8xf32>
    %cst_22 = arith.constant dense<0.000000e+00> : vector<8xf32>
    %65 = vector.multi_reduction <add>, %64, %cst_22 [1] : vector<8x8xf32> to vector<8xf32>
    %66 = vector.shape_cast %65 : vector<8xf32> to vector<8x1xf32>
    %67 = tpu.reciprocal %66 {approx = true} : vector<8x1xf32> -> vector<8x1xf32>
    %68 = vector.broadcast %67 : vector<8x1xf32> to vector<8x8xf32>
    %69 = arith.mulf %64, %68 : vector<8x8xf32>
    %cst_23 = arith.constant dense<0.000000e+00> : vector<8x32xf32>
    %70 = tpu.matmul %69, %56, %cst_23 {dimension_numbers = #tpu.dot_dimension_numbers<[1], [0], [0], [1], [0, 0, 1, 1], [], []>} : vector<8x8xf32>, vector<8x32xf32>, vector<8x32xf32> -> vector<8x32xf32>
    %71 = arith.addf %53, %70 : vector<8x32xf32>
    %72 = vector.extract_strided_slice %6 {offsets = [0, 96], sizes = [8, 32], strides = [1, 1]} : vector<16x128xf32> to vector<8x32xf32>
    %73 = vector.extract_strided_slice %7 {offsets = [0, 96], sizes = [8, 32], strides = [1, 1]} : vector<16x128xf32> to vector<8x32xf32>
    %74 = vector.extract_strided_slice %8 {offsets = [0, 96], sizes = [8, 32], strides = [1, 1]} : vector<16x128xf32> to vector<8x32xf32>
    %cst_24 = arith.constant dense<0.000000e+00> : vector<8x8xf32>
    %75 = tpu.matmul %72, %73, %cst_24 {dimension_numbers = #tpu.dot_dimension_numbers<[1], [1], [0], [0], [0, 0, 1, 0], [], []>} : vector<8x32xf32>, vector<8x32xf32>, vector<8x8xf32> -> vector<8x8xf32>
    %76 = vector.broadcast %16 : vector<1x8xf32> to vector<8x8xf32>
    %77 = arith.addf %75, %76 : vector<8x8xf32>
    %cst_25 = arith.constant dense<0xFF800000> : vector<8xf32>
    %78 = vector.multi_reduction <maximumf>, %77, %cst_25 [1] : vector<8x8xf32> to vector<8xf32>
    %79 = vector.shape_cast %78 : vector<8xf32> to vector<8x1xf32>
    %80 = vector.broadcast %79 : vector<8x1xf32> to vector<8x8xf32>
    %81 = arith.subf %77, %80 : vector<8x8xf32>
    %82 = math.exp %81 : vector<8x8xf32>
    %cst_26 = arith.constant dense<0.000000e+00> : vector<8xf32>
    %83 = vector.multi_reduction <add>, %82, %cst_26 [1] : vector<8x8xf32> to vector<8xf32>
    %84 = vector.shape_cast %83 : vector<8xf32> to vector<8x1xf32>
    %85 = tpu.reciprocal %84 {approx = true} : vector<8x1xf32> -> vector<8x1xf32>
    %86 = vector.broadcast %85 : vector<8x1xf32> to vector<8x8xf32>
    %87 = arith.mulf %82, %86 : vector<8x8xf32>
    %cst_27 = arith.constant dense<0.000000e+00> : vector<8x32xf32>
    %88 = tpu.matmul %87, %74, %cst_27 {dimension_numbers = #tpu.dot_dimension_numbers<[1], [0], [0], [1], [0, 0, 1, 1], [], []>} : vector<8x8xf32>, vector<8x32xf32>, vector<8x32xf32> -> vector<8x32xf32>
    %89 = arith.addf %71, %88 : vector<8x32xf32>
    %90 = vector.broadcast %15 : vector<1x32xf32> to vector<8x32xf32>
    %91 = arith.addf %89, %90 : vector<8x32xf32>
    %92 = vector.extract_strided_slice %14 {offsets = [1, 0], sizes = [1, 8], strides = [1, 1]} : vector<2x8xf32> to vector<1x8xf32>
    %cst_28 = arith.constant 0.000000e+00 : f32
    %93 = vector.broadcast %cst_28 : f32 to vector<8x32xf32>
    %94 = vector.extract_strided_slice %6 {offsets = [8, 0], sizes = [8, 32], strides = [1, 1]} : vector<16x128xf32> to vector<8x32xf32>
    %95 = vector.extract_strided_slice %7 {offsets = [8, 0], sizes = [8, 32], strides = [1, 1]} : vector<16x128xf32> to vector<8x32xf32>
    %96 = vector.extract_strided_slice %8 {offsets = [8, 0], sizes = [8, 32], strides = [1, 1]} : vector<16x128xf32> to vector<8x32xf32>
    %cst_29 = arith.constant dense<0.000000e+00> : vector<8x8xf32>
    %97 = tpu.matmul %94, %95, %cst_29 {dimension_numbers = #tpu.dot_dimension_numbers<[1], [1], [0], [0], [0, 0, 1, 0], [], []>} : vector<8x32xf32>, vector<8x32xf32>, vector<8x8xf32> -> vector<8x8xf32>
    %98 = vector.broadcast %92 : vector<1x8xf32> to vector<8x8xf32>
    %99 = arith.addf %97, %98 : vector<8x8xf32>
    %cst_30 = arith.constant dense<0xFF800000> : vector<8xf32>
    %100 = vector.multi_reduction <maximumf>, %99, %cst_30 [1] : vector<8x8xf32> to vector<8xf32>
    %101 = vector.shape_cast %100 : vector<8xf32> to vector<8x1xf32>
    %102 = vector.broadcast %101 : vector<8x1xf32> to vector<8x8xf32>
    %103 = arith.subf %99, %102 : vector<8x8xf32>
    %104 = math.exp %103 : vector<8x8xf32>
    %cst_31 = arith.constant dense<0.000000e+00> : vector<8xf32>
    %105 = vector.multi_reduction <add>, %104, %cst_31 [1] : vector<8x8xf32> to vector<8xf32>
    %106 = vector.shape_cast %105 : vector<8xf32> to vector<8x1xf32>
    %107 = tpu.reciprocal %106 {approx = true} : vector<8x1xf32> -> vector<8x1xf32>
    %108 = vector.broadcast %107 : vector<8x1xf32> to vector<8x8xf32>
    %109 = arith.mulf %104, %108 : vector<8x8xf32>
    %cst_32 = arith.constant dense<0.000000e+00> : vector<8x32xf32>
    %110 = tpu.matmul %109, %96, %cst_32 {dimension_numbers = #tpu.dot_dimension_numbers<[1], [0], [0], [1], [0, 0, 1, 1], [], []>} : vector<8x8xf32>, vector<8x32xf32>, vector<8x32xf32> -> vector<8x32xf32>
    %111 = arith.addf %93, %110 : vector<8x32xf32>
    %112 = vector.extract_strided_slice %6 {offsets = [8, 32], sizes = [8, 32], strides = [1, 1]} : vector<16x128xf32> to vector<8x32xf32>
    %113 = vector.extract_strided_slice %7 {offsets = [8, 32], sizes = [8, 32], strides = [1, 1]} : vector<16x128xf32> to vector<8x32xf32>
    %114 = vector.extract_strided_slice %8 {offsets = [8, 32], sizes = [8, 32], strides = [1, 1]} : vector<16x128xf32> to vector<8x32xf32>
    %cst_33 = arith.constant dense<0.000000e+00> : vector<8x8xf32>
    %115 = tpu.matmul %112, %113, %cst_33 {dimension_numbers = #tpu.dot_dimension_numbers<[1], [1], [0], [0], [0, 0, 1, 0], [], []>} : vector<8x32xf32>, vector<8x32xf32>, vector<8x8xf32> -> vector<8x8xf32>
    %116 = vector.broadcast %92 : vector<1x8xf32> to vector<8x8xf32>
    %117 = arith.addf %115, %116 : vector<8x8xf32>
    %cst_34 = arith.constant dense<0xFF800000> : vector<8xf32>
    %118 = vector.multi_reduction <maximumf>, %117, %cst_34 [1] : vector<8x8xf32> to vector<8xf32>
    %119 = vector.shape_cast %118 : vector<8xf32> to vector<8x1xf32>
    %120 = vector.broadcast %119 : vector<8x1xf32> to vector<8x8xf32>
    %121 = arith.subf %117, %120 : vector<8x8xf32>
    %122 = math.exp %121 : vector<8x8xf32>
    %cst_35 = arith.constant dense<0.000000e+00> : vector<8xf32>
    %123 = vector.multi_reduction <add>, %122, %cst_35 [1] : vector<8x8xf32> to vector<8xf32>
    %124 = vector.shape_cast %123 : vector<8xf32> to vector<8x1xf32>
    %125 = tpu.reciprocal %124 {approx = true} : vector<8x1xf32> -> vector<8x1xf32>
    %126 = vector.broadcast %125 : vector<8x1xf32> to vector<8x8xf32>
    %127 = arith.mulf %122, %126 : vector<8x8xf32>
    %cst_36 = arith.constant dense<0.000000e+00> : vector<8x32xf32>
    %128 = tpu.matmul %127, %114, %cst_36 {dimension_numbers = #tpu.dot_dimension_numbers<[1], [0], [0], [1], [0, 0, 1, 1], [], []>} : vector<8x8xf32>, vector<8x32xf32>, vector<8x32xf32> -> vector<8x32xf32>
    %129 = arith.addf %111, %128 : vector<8x32xf32>
    %130 = vector.extract_strided_slice %6 {offsets = [8, 64], sizes = [8, 32], strides = [1, 1]} : vector<16x128xf32> to vector<8x32xf32>
    %131 = vector.extract_strided_slice %7 {offsets = [8, 64], sizes = [8, 32], strides = [1, 1]} : vector<16x128xf32> to vector<8x32xf32>
    %132 = vector.extract_strided_slice %8 {offsets = [8, 64], sizes = [8, 32], strides = [1, 1]} : vector<16x128xf32> to vector<8x32xf32>
    %cst_37 = arith.constant dense<0.000000e+00> : vector<8x8xf32>
    %133 = tpu.matmul %130, %131, %cst_37 {dimension_numbers = #tpu.dot_dimension_numbers<[1], [1], [0], [0], [0, 0, 1, 0], [], []>} : vector<8x32xf32>, vector<8x32xf32>, vector<8x8xf32> -> vector<8x8xf32>
    %134 = vector.broadcast %92 : vector<1x8xf32> to vector<8x8xf32>
    %135 = arith.addf %133, %134 : vector<8x8xf32>
    %cst_38 = arith.constant dense<0xFF800000> : vector<8xf32>
    %136 = vector.multi_reduction <maximumf>, %135, %cst_38 [1] : vector<8x8xf32> to vector<8xf32>
    %137 = vector.shape_cast %136 : vector<8xf32> to vector<8x1xf32>
    %138 = vector.broadcast %137 : vector<8x1xf32> to vector<8x8xf32>
    %139 = arith.subf %135, %138 : vector<8x8xf32>
    %140 = math.exp %139 : vector<8x8xf32>
    %cst_39 = arith.constant dense<0.000000e+00> : vector<8xf32>
    %141 = vector.multi_reduction <add>, %140, %cst_39 [1] : vector<8x8xf32> to vector<8xf32>
    %142 = vector.shape_cast %141 : vector<8xf32> to vector<8x1xf32>
    %143 = tpu.reciprocal %142 {approx = true} : vector<8x1xf32> -> vector<8x1xf32>
    %144 = vector.broadcast %143 : vector<8x1xf32> to vector<8x8xf32>
    %145 = arith.mulf %140, %144 : vector<8x8xf32>
    %cst_40 = arith.constant dense<0.000000e+00> : vector<8x32xf32>
    %146 = tpu.matmul %145, %132, %cst_40 {dimension_numbers = #tpu.dot_dimension_numbers<[1], [0], [0], [1], [0, 0, 1, 1], [], []>} : vector<8x8xf32>, vector<8x32xf32>, vector<8x32xf32> -> vector<8x32xf32>
    %147 = arith.addf %129, %146 : vector<8x32xf32>
    %148 = vector.extract_strided_slice %6 {offsets = [8, 96], sizes = [8, 32], strides = [1, 1]} : vector<16x128xf32> to vector<8x32xf32>
    %149 = vector.extract_strided_slice %7 {offsets = [8, 96], sizes = [8, 32], strides = [1, 1]} : vector<16x128xf32> to vector<8x32xf32>
    %150 = vector.extract_strided_slice %8 {offsets = [8, 96], sizes = [8, 32], strides = [1, 1]} : vector<16x128xf32> to vector<8x32xf32>
    %cst_41 = arith.constant dense<0.000000e+00> : vector<8x8xf32>
    %151 = tpu.matmul %148, %149, %cst_41 {dimension_numbers = #tpu.dot_dimension_numbers<[1], [1], [0], [0], [0, 0, 1, 0], [], []>} : vector<8x32xf32>, vector<8x32xf32>, vector<8x8xf32> -> vector<8x8xf32>
    %152 = vector.broadcast %92 : vector<1x8xf32> to vector<8x8xf32>
    %153 = arith.addf %151, %152 : vector<8x8xf32>
    %cst_42 = arith.constant dense<0xFF800000> : vector<8xf32>
    %154 = vector.multi_reduction <maximumf>, %153, %cst_42 [1] : vector<8x8xf32> to vector<8xf32>
    %155 = vector.shape_cast %154 : vector<8xf32> to vector<8x1xf32>
    %156 = vector.broadcast %155 : vector<8x1xf32> to vector<8x8xf32>
    %157 = arith.subf %153, %156 : vector<8x8xf32>
    %158 = math.exp %157 : vector<8x8xf32>
    %cst_43 = arith.constant dense<0.000000e+00> : vector<8xf32>
    %159 = vector.multi_reduction <add>, %158, %cst_43 [1] : vector<8x8xf32> to vector<8xf32>
    %160 = vector.shape_cast %159 : vector<8xf32> to vector<8x1xf32>
    %161 = tpu.reciprocal %160 {approx = true} : vector<8x1xf32> -> vector<8x1xf32>
    %162 = vector.broadcast %161 : vector<8x1xf32> to vector<8x8xf32>
    %163 = arith.mulf %158, %162 : vector<8x8xf32>
    %cst_44 = arith.constant dense<0.000000e+00> : vector<8x32xf32>
    %164 = tpu.matmul %163, %150, %cst_44 {dimension_numbers = #tpu.dot_dimension_numbers<[1], [0], [0], [1], [0, 0, 1, 1], [], []>} : vector<8x8xf32>, vector<8x32xf32>, vector<8x32xf32> -> vector<8x32xf32>
    %165 = arith.addf %147, %164 : vector<8x32xf32>
    %166 = vector.broadcast %15 : vector<1x32xf32> to vector<8x32xf32>
    %167 = arith.addf %165, %166 : vector<8x32xf32>
    %168 = tpu.concatenate %91, %167 in 0 : vector<8x32xf32>, vector<8x32xf32> -> vector<16x32xf32>
    %c0_45 = arith.constant 0 : index
    %c0_46 = arith.constant 0 : index
    %169 = vector.load %arg6[%c0_45, %c0_46] : memref<16x32xf32, #tpu.memory_space<vmem>>, vector<16x32xf32>
    tpu.vector_store %arg6[%c0_45, %c0_46], %168 {strides = array<i32>} : memref<16x32xf32, #tpu.memory_space<vmem>>, vector<16x32xf32>,
    return
  }
  func.func @transform_0(%arg0: i32) -> (i32, i32) {
    %c0_i32 = arith.constant 0 : i32
    %c0_i32_0 = arith.constant 0 : i32
    return %arg0, %c0_i32 : i32, i32
  }
  func.func @transform_1(%arg0: i32) -> (i32, i32) {
    %c0_i32 = arith.constant 0 : i32
    %c0_i32_0 = arith.constant 0 : i32
    return %arg0, %c0_i32 : i32, i32
  }
  func.func @transform_2(%arg0: i32) -> (i32, i32) {
    %c0_i32 = arith.constant 0 : i32
    %c0_i32_0 = arith.constant 0 : i32
    %c0_i32_1 = arith.constant 0 : i32
    return %c0_i32, %c0_i32_0 : i32, i32
  }
  func.func @transform_3(%arg0: i32) -> (i32, i32) {
    %c0_i32 = arith.constant 0 : i32
    %c0_i32_0 = arith.constant 0 : i32
    %c0_i32_1 = arith.constant 0 : i32
    return %c0_i32, %c0_i32_0 : i32, i32
  }
  func.func @transform_4(%arg0: i32) -> (i32, i32) {
    %c0_i32 = arith.constant 0 : i32
    %c0_i32_0 = arith.constant 0 : i32
    %c0_i32_1 = arith.constant 0 : i32
    return %c0_i32, %c0_i32_0 : i32, i32
  }
  func.func @transform_5(%arg0: i32) -> (i32, i32) {
    %c0_i32 = arith.constant 0 : i32
    %c0_i32_0 = arith.constant 0 : i32
    return %arg0, %c0_i32 : i32, i32
  }
}

</mosaic_0001>

<llo_original>
// kernel: tpu_custom_call.1
$region0: #{tpu_custom_call.1}
  #allocation0 [shape = 'u32[]', space=smem, size = 0x4, offset = 0x4, fixed_abs, tag = 'smem constant byte address 0x4 - core index']
  #allocation1 [shape = 'u32[144,128]{1,0:T(1,128)}', space=vmem, size = 0x12000, scoped, tag = 'internal scratch']
  %s0 = inlined_call_operand.hbm [shape: f32[16,32], index: 0, kind: input, shape index: {}]
  %s1 = inlined_call_operand.vmem [shape: s32[2,8], index: 1, kind: input, shape index: {}]
  %s2 = inlined_call_operand.hbm [shape: f32[32,384], index: 2, kind: input, shape index: {}]
  %s3 = inlined_call_operand.vmem [shape: f32[1,384], index: 3, kind: input, shape index: {}]
  %s4 = inlined_call_operand.vmem [shape: f32[1,32], index: 4, kind: input, shape index: {}]
  %s5 = inlined_call_operand.hbm [shape: f32[16,32], index: 5, kind: output, shape index: {}]
  %s6 = sld [smem:[#allocation0]]
  $region38: #{tpu_custom_call.1} parent=0
    _
  %s8 = ssub.s32 1, %s6
  %s9 = scalar_select 0, %s8, %s6
  $region1: #{tpu_custom_call.1} parent=0
    #allocation2 [shape = 'u8[8192]{0}', space=vmem, size = 0x2000, scoped, tag = 'input window, operand 0, single buffered']
    #allocation3 [shape = 's32[1]{0}', space=sflag, size = 0x4, scoped, tag = 'scoped memory for tpu_custom_call.1']
    #allocation4 [shape = 's32[1]{0}', space=sflag, size = 0x4, scoped, tag = 'scoped memory for tpu_custom_call.1']
    #allocation5 [shape = 'u8[49152]{0}', space=vmem, size = 0xc000, scoped, tag = 'input window, operand 2, single buffered']
    #allocation6 [shape = 's32[1]{0}', space=sflag, size = 0x4, scoped, tag = 'scoped memory for tpu_custom_call.1']
    #allocation7 [shape = 'u8[8192]{0}', space=vmem, size = 0x2000, scoped, tag = 'output window, operand 0, single buffered']
    %10 = vsyncpa [#allocation3], 0
    %11 = vsyncpa [#allocation6], 0
    %12 = vsyncpa [#allocation4], 0
    // Predicated region
    $region2: #{tpu_custom_call.1} parent=1 // pred_check
      _
    $region3: #{tpu_custom_call.1} parent=1 // pred_check_branch
      %14 = sbr.rel (0) target = $region5
    $region4: #{tpu_custom_call.1} parent=1 // pred_region
      %s16 = ssub.s32 256, 256
      %17 = vsyncadd [#allocation3], %s16
      %s18 = sshll.u32 [#allocation2], 4
      %s19 = int_to_ptr.vmem [resolvable:$true] %s18
      %24 = dma.hbm_to_vmem [thread:$0]  %s0, 256, %s19, [#allocation3], 128, 128, 8
    $region5: #{tpu_custom_call.1} parent=1 // pred_fallthru
      _
    // Predicated region
    $region6: #{tpu_custom_call.1} parent=1 // pred_check
      _
    $region7: #{tpu_custom_call.1} parent=1 // pred_check_branch
      %26 = sbr.rel (0) target = $region9
    $region8: #{tpu_custom_call.1} parent=1 // pred_region
      _
    $region9: #{tpu_custom_call.1} parent=1 // pred_fallthru
      _
    // Predicated region
    $region10: #{tpu_custom_call.1} parent=1 // pred_check
      _
    $region11: #{tpu_custom_call.1} parent=1 // pred_check_branch
      %28 = sbr.rel (0) target = $region13
    $region12: #{tpu_custom_call.1} parent=1 // pred_region
      %s30 = ssub.s32 1536, 1536
      %31 = vsyncadd [#allocation6], %s30
      %s32 = sshll.u32 [#allocation5], 4
      %s33 = int_to_ptr.vmem [resolvable:$true] %s32
      %38 = dma.hbm_to_vmem [thread:$0]  %s2, 1536, %s33, [#allocation6], 384, 384, 24
    $region13: #{tpu_custom_call.1} parent=1 // pred_fallthru
      _
    // Predicated region
    $region14: #{tpu_custom_call.1} parent=1 // pred_check
      _
    $region15: #{tpu_custom_call.1} parent=1 // pred_check_branch
      %40 = sbr.rel (0) target = $region17
    $region16: #{tpu_custom_call.1} parent=1 // pred_region
      _
    $region17: #{tpu_custom_call.1} parent=1 // pred_fallthru
      _
    // Predicated region
    $region18: #{tpu_custom_call.1} parent=1 // pred_check
      _
    $region19: #{tpu_custom_call.1} parent=1 // pred_check_branch
      %42 = sbr.rel (0) target = $region21
    $region20: #{tpu_custom_call.1} parent=1 // pred_region
      _
    $region21: #{tpu_custom_call.1} parent=1 // pred_fallthru
      _
    // Predicated region
    $region22: #{tpu_custom_call.1} parent=1 // pred_check
      _
    $region23: #{tpu_custom_call.1} parent=1 // pred_check_branch
      %44 = sbr.rel (0) target = $region25
    $region24: #{tpu_custom_call.1} parent=1 // pred_region
      %45 = dma.done [#allocation3], 256
    $region25: #{tpu_custom_call.1} parent=1 // pred_fallthru
      _
    // Predicated region
    $region26: #{tpu_custom_call.1} parent=1 // pred_check
      _
    $region27: #{tpu_custom_call.1} parent=1 // pred_check_branch
      %47 = sbr.rel (0) target = $region29
    $region28: #{tpu_custom_call.1} parent=1 // pred_region
      %48 = dma.done [#allocation6], 1536
    $region29: #{tpu_custom_call.1} parent=1 // pred_fallthru
      _
    %v49 = vld [vmem:[#allocation2] sm:$0xff]
    %v50 = vld [vmem:[#allocation2 + $0x8] sm:$0xff]
    %v51 = vld [vmem:[#allocation5] sm:$0xff]
    %v52 = vld [vmem:[#allocation5 + $0x8] sm:$0xff]
    %v53 = vld [vmem:[#allocation5 + $0x10] sm:$0xff]
    %v54 = vld [vmem:[#allocation5 + $0x18] sm:$0xff]
    %v55 = vld [vmem:[#allocation5 + $0x20] sm:$0xff]
    %v56 = vld [vmem:[#allocation5 + $0x28] sm:$0xff]
    %v57 = vld [vmem:[#allocation5 + $0x30] sm:$0xff]
    %v58 = vld [vmem:[#allocation5 + $0x38] sm:$0xff]
    %v59 = vld [vmem:[#allocation5 + $0x40] sm:$0xff]
    %v60 = vld [vmem:[#allocation5 + $0x48] sm:$0xff]
    %v61 = vld [vmem:[#allocation5 + $0x50] sm:$0xff]
    %v62 = vld [vmem:[#allocation5 + $0x58] sm:$0xff]
    %v63 = vld [vmem:[%s3] sm:$0x7]
    %v65 = vlaneseq
    %v66 = vshrl.u32 %v65, 7
    %v67 = vsub.s32 0, %v66
    %v68 = vrot.slane %v63, %v67
    %v69 = vlaneseq
    %v70 = vshrl.u32 %v69, 7
    %v71 = vsub.s32 1, %v70
    %v72 = vrot.slane %v63, %v71
    %v73 = vlaneseq
    %v74 = vshrl.u32 %v73, 7
    %v75 = vsub.s32 2, %v74
    %v76 = vrot.slane %v63, %v75
    %vm80 = vcmask 261120
    %v82 = vsel %vm80, %v49, 0
    %v85 = vsel %vm80, %v50, 0
    %87 = vmatprep.subr.mxu0 %v52
    %88 = vmatpush1.msra.mxu0 %v51
    %89 = vmatprep.subr.mxu0 %v55
    %90 = vmatpush1.msra.mxu0 %v54
    %91 = vmatprep.subr.mxu0 %v58
    %92 = vmatpush1.msra.mxu0 %v57
    %93 = vmatprep.subr.mxu0 %v61
    %94 = vmatpush1.msra.mxu0 %v60
    %95 = vmatprep.subr.mxu0 0.0
    %96 = vmatpush1.msra.mxu0 0.0
    %97 = vmatprep.subr.mxu0 0.0
    %98 = vmatpush1.msra.mxu0 0.0
    %99 = vmatprep.subr.mxu0 0.0
    %100 = vmatpush1.msra.mxu0 0.0
    %101 = vmatprep.subr.mxu0 0.0
    %102 = vmatpush1.msra.mxu0 0.0
    %103 = vmatprep.subr.mxu0 0.0
    %104 = vmatpush1.msra.mxu0 0.0
    %105 = vmatprep.subr.mxu0 0.0
    %106 = vmatpush1.msra.mxu0 0.0
    %107 = vmatprep.subr.mxu0 0.0
    %108 = vmatpush1.msra.mxu0 0.0
    %109 = vmatprep.subr.mxu0 0.0
    %110 = vmatpush1.msra.mxu0 0.0
    %111 = vmatprep.subr.mxu0 0.0
    %112 = vmatpush1.msra.mxu0 0.0
    %113 = vmatprep.subr.mxu0 0.0
    %114 = vmatpush1.msra.mxu0 0.0
    %115 = vmatprep.subr.mxu0 0.0
    %116 = vmatpush1.msra.mxu0 0.0
    %117 = vmatprep.subr.mxu0 0.0
    %118 = vmatpush1.msra.mxu0 0.0
    %119 = vmatprep.subr.mxu0 0.0
    %120 = vmatpush1.msra.mxu0 0.0
    %121 = vmatprep.subr.mxu0 0.0
    %122 = vmatpush1.msra.mxu0 0.0
    %123 = vmatprep.subr.mxu0 0.0
    %124 = vmatpush1.msra.mxu0 0.0
    %125 = vmatprep.subr.mxu0 0.0
    %126 = vmatpush1.msra.mxu0 0.0
    %127 = vmatprep.subr.mxu0 0.0
    %128 = vmatpush1.msra.mxu0 0.0
    %129 = vmatprep.subr.mxu0 0.0
    %130 = vmatpush1.msra.mxu0 0.0
    %131 = vmatprep.subr.mxu0 0.0
    %132 = vmatpush1.msra.mxu0 0.0
    %133 = vmatprep.subr.mxu0 0.0
    %134 = vmatpush1.msra.mxu0 0.0
    %135 = vmatprep.subr.mxu0 0.0
    %136 = vmatpush1.msra.mxu0 0.0
    %137 = vmatprep.subr.mxu0 0.0
    %138 = vmatpush1.msra.mxu0 0.0
    %139 = vmatprep.subr.mxu0 0.0
    %140 = vmatpush1.msra.mxu0 0.0
    %141 = vmatprep.subr.mxu0 0.0
    %142 = vmatpush1.msra.mxu0 0.0
    %143 = vmatprep.subr.mxu0 0.0
    %144 = vmatpush1.msra.mxu0 0.0
    %145 = vmatprep.subr.mxu0 0.0
    %146 = vmatpush1.msra.mxu0 0.0
    %147 = vmatprep.subr.mxu0 0.0
    %148 = vmatpush1.msra.mxu0 0.0
    %149 = vmatprep.subr.mxu0 0.0
    %150 = vmatpush1.msra.mxu0 0.0
    %151 = vmatprep.mubr.f32.mxu0 0.0
    %152 = vmatmul.mubr.f32.gmra.mrb[0].mxu0 %v82
    %v153 = vpop.f32.mrb[0].mxu0
    %v154 = vadd.f32 %v68, %v153
    %v155 = vpop.f32.mrb[0].mxu0
    %v156 = vadd.f32 %v72, %v155
    %157 = vmatprep.mubr.f32.mxu0 0.0
    %158 = vmatmul.mubr.f32.gmra.mrb[0].mxu0 %v85
    %v159 = vpop.f32.mrb[0].mxu0
    %v160 = vadd.f32 %v68, %v159
    %v161 = vpop.f32.mrb[0].mxu0
    %v162 = vadd.f32 %v72, %v161
    %163 = vdwg.mxu0
    %164 = vmatprep.subr.mxu0 0.0
    %165 = vmatpush1.msra.mxu0 %v53
    %166 = vmatprep.subr.mxu0 0.0
    %167 = vmatpush1.msra.mxu0 %v56
    %168 = vmatprep.subr.mxu0 0.0
    %169 = vmatpush1.msra.mxu0 %v59
    %170 = vmatprep.subr.mxu0 0.0
    %171 = vmatpush1.msra.mxu0 %v62
    %172 = vmatprep.subr.mxu0 0.0
    %173 = vmatpush1.msra.mxu0 0.0
    %174 = vmatprep.subr.mxu0 0.0
    %175 = vmatpush1.msra.mxu0 0.0
    %176 = vmatprep.subr.mxu0 0.0
    %177 = vmatpush1.msra.mxu0 0.0
    %178 = vmatprep.subr.mxu0 0.0
    %179 = vmatpush1.msra.mxu0 0.0
    %180 = vmatprep.subr.mxu0 0.0
    %181 = vmatpush1.msra.mxu0 0.0
    %182 = vmatprep.subr.mxu0 0.0
    %183 = vmatpush1.msra.mxu0 0.0
    %184 = vmatprep.subr.mxu0 0.0
    %185 = vmatpush1.msra.mxu0 0.0
    %186 = vmatprep.subr.mxu0 0.0
    %187 = vmatpush1.msra.mxu0 0.0
    %188 = vmatprep.subr.mxu0 0.0
    %189 = vmatpush1.msra.mxu0 0.0
    %190 = vmatprep.subr.mxu0 0.0
    %191 = vmatpush1.msra.mxu0 0.0
    %192 = vmatprep.subr.mxu0 0.0
    %193 = vmatpush1.msra.mxu0 0.0
    %194 = vmatprep.subr.mxu0 0.0
    %195 = vmatpush1.msra.mxu0 0.0
    %196 = vmatprep.subr.mxu0 0.0
    %197 = vmatpush1.msra.mxu0 0.0
    %198 = vmatprep.subr.mxu0 0.0
    %199 = vmatpush1.msra.mxu0 0.0
    %200 = vmatprep.subr.mxu0 0.0
    %201 = vmatpush1.msra.mxu0 0.0
    %202 = vmatprep.subr.mxu0 0.0
    %203 = vmatpush1.msra.mxu0 0.0
    %204 = vmatprep.subr.mxu0 0.0
    %205 = vmatpush1.msra.mxu0 0.0
    %206 = vmatprep.subr.mxu0 0.0
    %207 = vmatpush1.msra.mxu0 0.0
    %208 = vmatprep.subr.mxu0 0.0
    %209 = vmatpush1.msra.mxu0 0.0
    %210 = vmatprep.subr.mxu0 0.0
    %211 = vmatpush1.msra.mxu0 0.0
    %212 = vmatprep.subr.mxu0 0.0
    %213 = vmatpush1.msra.mxu0 0.0
    %214 = vmatprep.subr.mxu0 0.0
    %215 = vmatpush1.msra.mxu0 0.0
    %216 = vmatprep.subr.mxu0 0.0
    %217 = vmatpush1.msra.mxu0 0.0
    %218 = vmatprep.subr.mxu0 0.0
    %219 = vmatpush1.msra.mxu0 0.0
    %220 = vmatprep.subr.mxu0 0.0
    %221 = vmatpush1.msra.mxu0 0.0
    %222 = vmatprep.subr.mxu0 0.0
    %223 = vmatpush1.msra.mxu0 0.0
    %224 = vmatprep.subr.mxu0 0.0
    %225 = vmatpush1.msra.mxu0 0.0
    %226 = vmatprep.subr.mxu0 0.0
    %227 = vmatpush1.msra.mxu0 0.0
    %228 = vmatprep.mubr.f32.mxu0 0.0
    %229 = vmatmul.mubr.f32.gmra.mrb[0].mxu0 %v82
    %v230 = vpop.f32.mrb[0].mxu0
    %v231 = vadd.f32 %v76, %v230
    %v232 = vpop.f32.mrb[0].mxu0
    %233 = vmatprep.mubr.f32.mxu0 0.0
    %234 = vmatmul.mubr.f32.gmra.mrb[0].mxu0 %v85
    %v235 = vpop.f32.mrb[0].mxu0
    %v236 = vadd.f32 %v76, %v235
    %v237 = vpop.f32.mrb[0].mxu0
    %238 = vdwg.mxu0
    %v239 = vld [vmem:[%s1] sm:$0x3]
    %vm240 = vcmp.eq.s32.totalorder %v239, 0
    %v241 = vsel %vm240, -10000.0, 0.0
    %v242 = vld [vmem:[%s4] sm:$0x1]
    %v243 = vlaneseq
    %v244 = vshrl.u32 %v243, 7
    %v245 = vsub.s32 0, %v244
    %v246 = vrot.slane %v241, %v245
    %v248 = vsel %vm80, %v154, 0
    %v251 = vsel %vm80, %v156, 0
    %253 = vmatprep.subr.mxu0 0.0
    %254 = vmatpush1.xpose.msra.mxu0 %v251
    %255 = vmatprep.subr.mxu0 0.0
    %256 = vmatpush1.xpose.msra.mxu0 0.0
    %257 = vmatprep.subr.mxu0 0.0
    %258 = vmatpush1.xpose.msra.mxu0 0.0
    %259 = vmatprep.subr.mxu0 0.0
    %260 = vmatpush1.xpose.msra.mxu0 0.0
    %261 = vmatprep.subr.mxu0 0.0
    %262 = vmatpush1.xpose.msra.mxu0 0.0
    %263 = vmatprep.subr.mxu0 0.0
    %264 = vmatpush1.xpose.msra.mxu0 0.0
    %265 = vmatprep.subr.mxu0 0.0
    %266 = vmatpush1.xpose.msra.mxu0 0.0
    %267 = vmatprep.subr.mxu0 0.0
    %268 = vmatpush1.xpose.msra.mxu0 0.0
    %269 = vmatprep.subr.mxu0 0.0
    %270 = vmatpush1.xpose.msra.mxu0 0.0
    %271 = vmatprep.subr.mxu0 0.0
    %272 = vmatpush1.xpose.msra.mxu0 0.0
    %273 = vmatprep.subr.mxu0 0.0
    %274 = vmatpush1.xpose.msra.mxu0 0.0
    %275 = vmatprep.subr.mxu0 0.0
    %276 = vmatpush1.xpose.msra.mxu0 0.0
    %277 = vmatprep.subr.mxu0 0.0
    %278 = vmatpush1.xpose.msra.mxu0 0.0
    %279 = vmatprep.subr.mxu0 0.0
    %280 = vmatpush1.xpose.msra.mxu0 0.0
    %281 = vmatprep.subr.mxu0 0.0
    %282 = vmatpush1.xpose.msra.mxu0 0.0
    %283 = vmatprep.subr.mxu0 0.0
    %284 = vmatpush1.xpose.msra.mxu0 0.0
    %285 = vmatprep.subr.mxu0 0.0
    %286 = vmatpush1.xpose.msra.mxu0 0.0
    %287 = vmatprep.subr.mxu0 0.0
    %288 = vmatpush1.xpose.msra.mxu0 0.0
    %289 = vmatprep.subr.mxu0 0.0
    %290 = vmatpush1.xpose.msra.mxu0 0.0
    %291 = vmatprep.subr.mxu0 0.0
    %292 = vmatpush1.xpose.msra.mxu0 0.0
    %293 = vmatprep.subr.mxu0 0.0
    %294 = vmatpush1.xpose.msra.mxu0 0.0
    %295 = vmatprep.subr.mxu0 0.0
    %296 = vmatpush1.xpose.msra.mxu0 0.0
    %297 = vmatprep.subr.mxu0 0.0
    %298 = vmatpush1.xpose.msra.mxu0 0.0
    %299 = vmatprep.subr.mxu0 0.0
    %300 = vmatpush1.xpose.msra.mxu0 0.0
    %301 = vmatprep.subr.mxu0 0.0
    %302 = vmatpush1.xpose.msra.mxu0 0.0
    %303 = vmatprep.subr.mxu0 0.0
    %304 = vmatpush1.xpose.msra.mxu0 0.0
    %305 = vmatprep.subr.mxu0 0.0
    %306 = vmatpush1.xpose.msra.mxu0 0.0
    %307 = vmatprep.subr.mxu0 0.0
    %308 = vmatpush1.xpose.msra.mxu0 0.0
    %309 = vmatprep.subr.mxu0 0.0
    %310 = vmatpush1.xpose.msra.mxu0 0.0
    %311 = vmatprep.subr.mxu0 0.0
    %312 = vmatpush1.xpose.msra.mxu0 0.0
    %313 = vmatprep.subr.mxu0 0.0
    %314 = vmatpush1.xpose.msra.mxu0 0.0
    %315 = vmatprep.subr.mxu0 0.0
    %316 = vmatpush1.xpose.msra.mxu0 0.0
    %317 = vmatprep.mubr.f32.mxu0 0.0
    %318 = vmatmul.mubr.f32.gmra.mrb[0].mxu0 %v248
    %v319 = vpop.f32.mrb[0].mxu0
    %v320 = vadd.f32 %v246, %v319
    %v321 = vpop.f32.mrb[0].mxu0
    %322 = vdwg.mxu0
    %vm323 = vcmask 64512
    %v324 = vsel %vm323, %v320, -inf
    %325 = vmax.xlane.f32.xlu0 %v324
    %v326 = vpop.xlane.xlu0 %325
    %v327 = vsub.f32 %v320, %v326
    %v328 = vmul.f32 %v327, 1.442695
    %v329 = vpow.pop %v328
    %v330 = vsel %vm323, %v329, 0.0
    %331 = vadd.xlane.f32.xlu0 %v330
    %v332 = vpop.xlane.xlu0 %331
    %v333 = vrcp.pop %v332
    %v334 = vmul.f32 %v329, %v333
    %335 = vrot.lane.b32.xlu0 %v154, 96
    %v336 = vpop.permute.xlu0 %335
    %337 = vrot.lane.b32.xlu0 %v156, 96
    %v338 = vpop.permute.xlu0 %337
    %v339 = vsel %vm80, %v336, 0
    %v341 = vsel %vm80, %v338, 0
    %343 = vmatprep.subr.mxu0 0.0
    %344 = vmatpush1.xpose.msra.mxu0 %v341
    %345 = vmatprep.subr.mxu0 0.0
    %346 = vmatpush1.xpose.msra.mxu0 0.0
    %347 = vmatprep.subr.mxu0 0.0
    %348 = vmatpush1.xpose.msra.mxu0 0.0
    %349 = vmatprep.subr.mxu0 0.0
    %350 = vmatpush1.xpose.msra.mxu0 0.0
    %351 = vmatprep.subr.mxu0 0.0
    %352 = vmatpush1.xpose.msra.mxu0 0.0
    %353 = vmatprep.subr.mxu0 0.0
    %354 = vmatpush1.xpose.msra.mxu0 0.0
    %355 = vmatprep.subr.mxu0 0.0
    %356 = vmatpush1.xpose.msra.mxu0 0.0
    %357 = vmatprep.subr.mxu0 0.0
    %358 = vmatpush1.xpose.msra.mxu0 0.0
    %359 = vmatprep.subr.mxu0 0.0
    %360 = vmatpush1.xpose.msra.mxu0 0.0
    %361 = vmatprep.subr.mxu0 0.0
    %362 = vmatpush1.xpose.msra.mxu0 0.0
    %363 = vmatprep.subr.mxu0 0.0
    %364 = vmatpush1.xpose.msra.mxu0 0.0
    %365 = vmatprep.subr.mxu0 0.0
    %366 = vmatpush1.xpose.msra.mxu0 0.0
    %367 = vmatprep.subr.mxu0 0.0
    %368 = vmatpush1.xpose.msra.mxu0 0.0
    %369 = vmatprep.subr.mxu0 0.0
    %370 = vmatpush1.xpose.msra.mxu0 0.0
    %371 = vmatprep.subr.mxu0 0.0
    %372 = vmatpush1.xpose.msra.mxu0 0.0
    %373 = vmatprep.subr.mxu0 0.0
    %374 = vmatpush1.xpose.msra.mxu0 0.0
    %375 = vmatprep.subr.mxu0 0.0
    %376 = vmatpush1.xpose.msra.mxu0 0.0
    %377 = vmatprep.subr.mxu0 0.0
    %378 = vmatpush1.xpose.msra.mxu0 0.0
    %379 = vmatprep.subr.mxu0 0.0
    %380 = vmatpush1.xpose.msra.mxu0 0.0
    %381 = vmatprep.subr.mxu0 0.0
    %382 = vmatpush1.xpose.msra.mxu0 0.0
    %383 = vmatprep.subr.mxu0 0.0
    %384 = vmatpush1.xpose.msra.mxu0 0.0
    %385 = vmatprep.subr.mxu0 0.0
    %386 = vmatpush1.xpose.msra.mxu0 0.0
    %387 = vmatprep.subr.mxu0 0.0
    %388 = vmatpush1.xpose.msra.mxu0 0.0
    %389 = vmatprep.subr.mxu0 0.0
    %390 = vmatpush1.xpose.msra.mxu0 0.0
    %391 = vmatprep.subr.mxu0 0.0
    %392 = vmatpush1.xpose.msra.mxu0 0.0
    %393 = vmatprep.subr.mxu0 0.0
    %394 = vmatpush1.xpose.msra.mxu0 0.0
    %395 = vmatprep.subr.mxu0 0.0
    %396 = vmatpush1.xpose.msra.mxu0 0.0
    %397 = vmatprep.subr.mxu0 0.0
    %398 = vmatpush1.xpose.msra.mxu0 0.0
    %399 = vmatprep.subr.mxu0 0.0
    %400 = vmatpush1.xpose.msra.mxu0 0.0
    %401 = vmatprep.subr.mxu0 0.0
    %402 = vmatpush1.xpose.msra.mxu0 0.0
    %403 = vmatprep.subr.mxu0 0.0
    %404 = vmatpush1.xpose.msra.mxu0 0.0
    %405 = vmatprep.subr.mxu0 0.0
    %406 = vmatpush1.xpose.msra.mxu0 0.0
    %407 = vmatprep.mubr.f32.mxu0 0.0
    %408 = vmatmul.mubr.f32.gmra.mrb[0].mxu0 %v339
    %v409 = vpop.f32.mrb[0].mxu0
    %v410 = vadd.f32 %v246, %v409
    %v411 = vpop.f32.mrb[0].mxu0
    %412 = vdwg.mxu0
    %v413 = vsel %vm323, %v410, -inf
    %414 = vmax.xlane.f32.xlu0 %v413
    %v415 = vpop.xlane.xlu0 %414
    %v416 = vsub.f32 %v410, %v415
    %v417 = vmul.f32 %v416, 1.442695
    %v418 = vpow.pop %v417
    %v419 = vsel %vm323, %v418, 0.0
    %420 = vadd.xlane.f32.xlu0 %v419
    %v421 = vpop.xlane.xlu0 %420
    %v422 = vrcp.pop %v421
    %v423 = vmul.f32 %v418, %v422
    %425 = vrot.lane.b32.xlu0 %v231, 96
    %v426 = vpop.permute.xlu0 %425
    %v429 = vsel %vm323, %v423, 0
    %431 = vmatprep.subr.mxu0 0.0
    %432 = vmatpush1.msra.mxu0 %v426
    %433 = vmatprep.subr.mxu0 0.0
    %434 = vmatpush1.msra.mxu0 0.0
    %435 = vmatprep.subr.mxu0 0.0
    %436 = vmatpush1.msra.mxu0 0.0
    %437 = vmatprep.subr.mxu0 0.0
    %438 = vmatpush1.msra.mxu0 0.0
    %439 = vmatprep.subr.mxu0 0.0
    %440 = vmatpush1.msra.mxu0 0.0
    %441 = vmatprep.subr.mxu0 0.0
    %442 = vmatpush1.msra.mxu0 0.0
    %443 = vmatprep.subr.mxu0 0.0
    %444 = vmatpush1.msra.mxu0 0.0
    %445 = vmatprep.subr.mxu0 0.0
    %446 = vmatpush1.msra.mxu0 0.0
    %447 = vmatprep.subr.mxu0 0.0
    %448 = vmatpush1.msra.mxu0 0.0
    %449 = vmatprep.subr.mxu0 0.0
    %450 = vmatpush1.msra.mxu0 0.0
    %451 = vmatprep.subr.mxu0 0.0
    %452 = vmatpush1.msra.mxu0 0.0
    %453 = vmatprep.subr.mxu0 0.0
    %454 = vmatpush1.msra.mxu0 0.0
    %455 = vmatprep.subr.mxu0 0.0
    %456 = vmatpush1.msra.mxu0 0.0
    %457 = vmatprep.subr.mxu0 0.0
    %458 = vmatpush1.msra.mxu0 0.0
    %459 = vmatprep.subr.mxu0 0.0
    %460 = vmatpush1.msra.mxu0 0.0
    %461 = vmatprep.subr.mxu0 0.0
    %462 = vmatpush1.msra.mxu0 0.0
    %463 = vmatprep.subr.mxu0 0.0
    %464 = vmatpush1.msra.mxu0 0.0
    %465 = vmatprep.subr.mxu0 0.0
    %466 = vmatpush1.msra.mxu0 0.0
    %467 = vmatprep.subr.mxu0 0.0
    %468 = vmatpush1.msra.mxu0 0.0
    %469 = vmatprep.subr.mxu0 0.0
    %470 = vmatpush1.msra.mxu0 0.0
    %471 = vmatprep.subr.mxu0 0.0
    %472 = vmatpush1.msra.mxu0 0.0
    %473 = vmatprep.subr.mxu0 0.0
    %474 = vmatpush1.msra.mxu0 0.0
    %475 = vmatprep.subr.mxu0 0.0
    %476 = vmatpush1.msra.mxu0 0.0
    %477 = vmatprep.subr.mxu0 0.0
    %478 = vmatpush1.msra.mxu0 0.0
    %479 = vmatprep.subr.mxu0 0.0
    %480 = vmatpush1.msra.mxu0 0.0
    %481 = vmatprep.subr.mxu0 0.0
    %482 = vmatpush1.msra.mxu0 0.0
    %483 = vmatprep.subr.mxu0 0.0
    %484 = vmatpush1.msra.mxu0 0.0
    %485 = vmatprep.subr.mxu0 0.0
    %486 = vmatpush1.msra.mxu0 0.0
    %487 = vmatprep.subr.mxu0 0.0
    %488 = vmatpush1.msra.mxu0 0.0
    %489 = vmatprep.subr.mxu0 0.0
    %490 = vmatpush1.msra.mxu0 0.0
    %491 = vmatprep.subr.mxu0 0.0
    %492 = vmatpush1.msra.mxu0 0.0
    %493 = vmatprep.subr.mxu0 0.0
    %494 = vmatpush1.msra.mxu0 0.0
    %495 = vmatprep.mubr.f32.mxu0 0.0
    %496 = vmatmul.mubr.f32.gmra.mrb[0].mxu0 %v429
    %v497 = vpop.f32.mrb[0].mxu0
    %v498 = vadd.f32 0.0, %v497
    %v499 = vpop.f32.mrb[0].mxu0
    %500 = vdwg.mxu0
    %v502 = vsel %vm323, %v334, 0
    %504 = vmatprep.subr.mxu0 0.0
    %505 = vmatpush1.msra.mxu0 %v231
    %506 = vmatprep.subr.mxu0 0.0
    %507 = vmatpush1.msra.mxu0 0.0
    %508 = vmatprep.subr.mxu0 0.0
    %509 = vmatpush1.msra.mxu0 0.0
    %510 = vmatprep.subr.mxu0 0.0
    %511 = vmatpush1.msra.mxu0 0.0
    %512 = vmatprep.subr.mxu0 0.0
    %513 = vmatpush1.msra.mxu0 0.0
    %514 = vmatprep.subr.mxu0 0.0
    %515 = vmatpush1.msra.mxu0 0.0
    %516 = vmatprep.subr.mxu0 0.0
    %517 = vmatpush1.msra.mxu0 0.0
    %518 = vmatprep.subr.mxu0 0.0
    %519 = vmatpush1.msra.mxu0 0.0
    %520 = vmatprep.subr.mxu0 0.0
    %521 = vmatpush1.msra.mxu0 0.0
    %522 = vmatprep.subr.mxu0 0.0
    %523 = vmatpush1.msra.mxu0 0.0
    %524 = vmatprep.subr.mxu0 0.0
    %525 = vmatpush1.msra.mxu0 0.0
    %526 = vmatprep.subr.mxu0 0.0
    %527 = vmatpush1.msra.mxu0 0.0
    %528 = vmatprep.subr.mxu0 0.0
    %529 = vmatpush1.msra.mxu0 0.0
    %530 = vmatprep.subr.mxu0 0.0
    %531 = vmatpush1.msra.mxu0 0.0
    %532 = vmatprep.subr.mxu0 0.0
    %533 = vmatpush1.msra.mxu0 0.0
    %534 = vmatprep.subr.mxu0 0.0
    %535 = vmatpush1.msra.mxu0 0.0
    %536 = vmatprep.subr.mxu0 0.0
    %537 = vmatpush1.msra.mxu0 0.0
    %538 = vmatprep.subr.mxu0 0.0
    %539 = vmatpush1.msra.mxu0 0.0
    %540 = vmatprep.subr.mxu0 0.0
    %541 = vmatpush1.msra.mxu0 0.0
    %542 = vmatprep.subr.mxu0 0.0
    %543 = vmatpush1.msra.mxu0 0.0
    %544 = vmatprep.subr.mxu0 0.0
    %545 = vmatpush1.msra.mxu0 0.0
    %546 = vmatprep.subr.mxu0 0.0
    %547 = vmatpush1.msra.mxu0 0.0
    %548 = vmatprep.subr.mxu0 0.0
    %549 = vmatpush1.msra.mxu0 0.0
    %550 = vmatprep.subr.mxu0 0.0
    %551 = vmatpush1.msra.mxu0 0.0
    %552 = vmatprep.subr.mxu0 0.0
    %553 = vmatpush1.msra.mxu0 0.0
    %554 = vmatprep.subr.mxu0 0.0
    %555 = vmatpush1.msra.mxu0 0.0
    %556 = vmatprep.subr.mxu0 0.0
    %557 = vmatpush1.msra.mxu0 0.0
    %558 = vmatprep.subr.mxu0 0.0
    %559 = vmatpush1.msra.mxu0 0.0
    %560 = vmatprep.subr.mxu0 0.0
    %561 = vmatpush1.msra.mxu0 0.0
    %562 = vmatprep.subr.mxu0 0.0
    %563 = vmatpush1.msra.mxu0 0.0
    %564 = vmatprep.subr.mxu0 0.0
    %565 = vmatpush1.msra.mxu0 0.0
    %566 = vmatprep.subr.mxu0 0.0
    %567 = vmatpush1.msra.mxu0 0.0
    %568 = vmatprep.mubr.f32.mxu0 0.0
    %569 = vmatmul.mubr.f32.gmra.mrb[0].mxu0 %v502
    %v570 = vpop.f32.mrb[0].mxu0
    %v571 = vadd.f32 %v498, %v570
    %v572 = vpop.f32.mrb[0].mxu0
    %573 = vdwg.mxu0
    %574 = vrot.lane.b32.xlu0 %v154, 64
    %v575 = vpop.permute.xlu0 %574
    %576 = vrot.lane.b32.xlu0 %v156, 64
    %v577 = vpop.permute.xlu0 %576
    %v578 = vsel %vm80, %v575, 0
    %v580 = vsel %vm80, %v577, 0
    %582 = vmatprep.subr.mxu0 0.0
    %583 = vmatpush1.xpose.msra.mxu0 %v580
    %584 = vmatprep.subr.mxu0 0.0
    %585 = vmatpush1.xpose.msra.mxu0 0.0
    %586 = vmatprep.subr.mxu0 0.0
    %587 = vmatpush1.xpose.msra.mxu0 0.0
    %588 = vmatprep.subr.mxu0 0.0
    %589 = vmatpush1.xpose.msra.mxu0 0.0
    %590 = vmatprep.subr.mxu0 0.0
    %591 = vmatpush1.xpose.msra.mxu0 0.0
    %592 = vmatprep.subr.mxu0 0.0
    %593 = vmatpush1.xpose.msra.mxu0 0.0
    %594 = vmatprep.subr.mxu0 0.0
    %595 = vmatpush1.xpose.msra.mxu0 0.0
    %596 = vmatprep.subr.mxu0 0.0
    %597 = vmatpush1.xpose.msra.mxu0 0.0
    %598 = vmatprep.subr.mxu0 0.0
    %599 = vmatpush1.xpose.msra.mxu0 0.0
    %600 = vmatprep.subr.mxu0 0.0
    %601 = vmatpush1.xpose.msra.mxu0 0.0
    %602 = vmatprep.subr.mxu0 0.0
    %603 = vmatpush1.xpose.msra.mxu0 0.0
    %604 = vmatprep.subr.mxu0 0.0
    %605 = vmatpush1.xpose.msra.mxu0 0.0
    %606 = vmatprep.subr.mxu0 0.0
    %607 = vmatpush1.xpose.msra.mxu0 0.0
    %608 = vmatprep.subr.mxu0 0.0
    %609 = vmatpush1.xpose.msra.mxu0 0.0
    %610 = vmatprep.subr.mxu0 0.0
    %611 = vmatpush1.xpose.msra.mxu0 0.0
    %612 = vmatprep.subr.mxu0 0.0
    %613 = vmatpush1.xpose.msra.mxu0 0.0
    %614 = vmatprep.subr.mxu0 0.0
    %615 = vmatpush1.xpose.msra.mxu0 0.0
    %616 = vmatprep.subr.mxu0 0.0
    %617 = vmatpush1.xpose.msra.mxu0 0.0
    %618 = vmatprep.subr.mxu0 0.0
    %619 = vmatpush1.xpose.msra.mxu0 0.0
    %620 = vmatprep.subr.mxu0 0.0
    %621 = vmatpush1.xpose.msra.mxu0 0.0
    %622 = vmatprep.subr.mxu0 0.0
    %623 = vmatpush1.xpose.msra.mxu0 0.0
    %624 = vmatprep.subr.mxu0 0.0
    %625 = vmatpush1.xpose.msra.mxu0 0.0
    %626 = vmatprep.subr.mxu0 0.0
    %627 = vmatpush1.xpose.msra.mxu0 0.0
    %628 = vmatprep.subr.mxu0 0.0
    %629 = vmatpush1.xpose.msra.mxu0 0.0
    %630 = vmatprep.subr.mxu0 0.0
    %631 = vmatpush1.xpose.msra.mxu0 0.0
    %632 = vmatprep.subr.mxu0 0.0
    %633 = vmatpush1.xpose.msra.mxu0 0.0
    %634 = vmatprep.subr.mxu0 0.0
    %635 = vmatpush1.xpose.msra.mxu0 0.0
    %636 = vmatprep.subr.mxu0 0.0
    %637 = vmatpush1.xpose.msra.mxu0 0.0
    %638 = vmatprep.subr.mxu0 0.0
    %639 = vmatpush1.xpose.msra.mxu0 0.0
    %640 = vmatprep.subr.mxu0 0.0
    %641 = vmatpush1.xpose.msra.mxu0 0.0
    %642 = vmatprep.subr.mxu0 0.0
    %643 = vmatpush1.xpose.msra.mxu0 0.0
    %644 = vmatprep.subr.mxu0 0.0
    %645 = vmatpush1.xpose.msra.mxu0 0.0
    %646 = vmatprep.mubr.f32.mxu0 0.0
    %647 = vmatmul.mubr.f32.gmra.mrb[0].mxu0 %v578
    %v648 = vpop.f32.mrb[0].mxu0
    %v649 = vadd.f32 %v246, %v648
    %v650 = vpop.f32.mrb[0].mxu0
    %651 = vdwg.mxu0
    %v652 = vsel %vm323, %v649, -inf
    %653 = vmax.xlane.f32.xlu0 %v652
    %v654 = vpop.xlane.xlu0 %653
    %v655 = vsub.f32 %v649, %v654
    %v656 = vmul.f32 %v655, 1.442695
    %v657 = vpow.pop %v656
    %v658 = vsel %vm323, %v657, 0.0
    %659 = vadd.xlane.f32.xlu0 %v658
    %v660 = vpop.xlane.xlu0 %659
    %v661 = vrcp.pop %v660
    %v662 = vmul.f32 %v657, %v661
    %663 = vrot.lane.b32.xlu0 %v231, 64
    %v664 = vpop.permute.xlu0 %663
    %v667 = vsel %vm323, %v662, 0
    %669 = vmatprep.subr.mxu0 0.0
    %670 = vmatpush1.msra.mxu0 %v664
    %671 = vmatprep.subr.mxu0 0.0
    %672 = vmatpush1.msra.mxu0 0.0
    %673 = vmatprep.subr.mxu0 0.0
    %674 = vmatpush1.msra.mxu0 0.0
    %675 = vmatprep.subr.mxu0 0.0
    %676 = vmatpush1.msra.mxu0 0.0
    %677 = vmatprep.subr.mxu0 0.0
    %678 = vmatpush1.msra.mxu0 0.0
    %679 = vmatprep.subr.mxu0 0.0
    %680 = vmatpush1.msra.mxu0 0.0
    %681 = vmatprep.subr.mxu0 0.0
    %682 = vmatpush1.msra.mxu0 0.0
    %683 = vmatprep.subr.mxu0 0.0
    %684 = vmatpush1.msra.mxu0 0.0
    %685 = vmatprep.subr.mxu0 0.0
    %686 = vmatpush1.msra.mxu0 0.0
    %687 = vmatprep.subr.mxu0 0.0
    %688 = vmatpush1.msra.mxu0 0.0
    %689 = vmatprep.subr.mxu0 0.0
    %690 = vmatpush1.msra.mxu0 0.0
    %691 = vmatprep.subr.mxu0 0.0
    %692 = vmatpush1.msra.mxu0 0.0
    %693 = vmatprep.subr.mxu0 0.0
    %694 = vmatpush1.msra.mxu0 0.0
    %695 = vmatprep.subr.mxu0 0.0
    %696 = vmatpush1.msra.mxu0 0.0
    %697 = vmatprep.subr.mxu0 0.0
    %698 = vmatpush1.msra.mxu0 0.0
    %699 = vmatprep.subr.mxu0 0.0
    %700 = vmatpush1.msra.mxu0 0.0
    %701 = vmatprep.subr.mxu0 0.0
    %702 = vmatpush1.msra.mxu0 0.0
    %703 = vmatprep.subr.mxu0 0.0
    %704 = vmatpush1.msra.mxu0 0.0
    %705 = vmatprep.subr.mxu0 0.0
    %706 = vmatpush1.msra.mxu0 0.0
    %707 = vmatprep.subr.mxu0 0.0
    %708 = vmatpush1.msra.mxu0 0.0
    %709 = vmatprep.subr.mxu0 0.0
    %710 = vmatpush1.msra.mxu0 0.0
    %711 = vmatprep.subr.mxu0 0.0
    %712 = vmatpush1.msra.mxu0 0.0
    %713 = vmatprep.subr.mxu0 0.0
    %714 = vmatpush1.msra.mxu0 0.0
    %715 = vmatprep.subr.mxu0 0.0
    %716 = vmatpush1.msra.mxu0 0.0
    %717 = vmatprep.subr.mxu0 0.0
    %718 = vmatpush1.msra.mxu0 0.0
    %719 = vmatprep.subr.mxu0 0.0
    %720 = vmatpush1.msra.mxu0 0.0
    %721 = vmatprep.subr.mxu0 0.0
    %722 = vmatpush1.msra.mxu0 0.0
    %723 = vmatprep.subr.mxu0 0.0
    %724 = vmatpush1.msra.mxu0 0.0
    %725 = vmatprep.subr.mxu0 0.0
    %726 = vmatpush1.msra.mxu0 0.0
    %727 = vmatprep.subr.mxu0 0.0
    %728 = vmatpush1.msra.mxu0 0.0
    %729 = vmatprep.subr.mxu0 0.0
    %730 = vmatpush1.msra.mxu0 0.0
    %731 = vmatprep.subr.mxu0 0.0
    %732 = vmatpush1.msra.mxu0 0.0
    %733 = vmatprep.mubr.f32.mxu0 0.0
    %734 = vmatmul.mubr.f32.gmra.mrb[0].mxu0 %v667
    %v735 = vpop.f32.mrb[0].mxu0
    %v736 = vadd.f32 0.0, %v735
    %v737 = vpop.f32.mrb[0].mxu0
    %738 = vdwg.mxu0
    %v739 = vadd.f32 %v571, %v736
    %740 = vrot.lane.b32.xlu0 %v154, 32
    %v741 = vpop.permute.xlu0 %740
    %742 = vrot.lane.b32.xlu0 %v156, 32
    %v743 = vpop.permute.xlu0 %742
    %v744 = vsel %vm80, %v741, 0
    %v746 = vsel %vm80, %v743, 0
    %748 = vmatprep.subr.mxu0 0.0
    %749 = vmatpush1.xpose.msra.mxu0 %v746
    %750 = vmatprep.subr.mxu0 0.0
    %751 = vmatpush1.xpose.msra.mxu0 0.0
    %752 = vmatprep.subr.mxu0 0.0
    %753 = vmatpush1.xpose.msra.mxu0 0.0
    %754 = vmatprep.subr.mxu0 0.0
    %755 = vmatpush1.xpose.msra.mxu0 0.0
    %756 = vmatprep.subr.mxu0 0.0
    %757 = vmatpush1.xpose.msra.mxu0 0.0
    %758 = vmatprep.subr.mxu0 0.0
    %759 = vmatpush1.xpose.msra.mxu0 0.0
    %760 = vmatprep.subr.mxu0 0.0
    %761 = vmatpush1.xpose.msra.mxu0 0.0
    %762 = vmatprep.subr.mxu0 0.0
    %763 = vmatpush1.xpose.msra.mxu0 0.0
    %764 = vmatprep.subr.mxu0 0.0
    %765 = vmatpush1.xpose.msra.mxu0 0.0
    %766 = vmatprep.subr.mxu0 0.0
    %767 = vmatpush1.xpose.msra.mxu0 0.0
    %768 = vmatprep.subr.mxu0 0.0
    %769 = vmatpush1.xpose.msra.mxu0 0.0
    %770 = vmatprep.subr.mxu0 0.0
    %771 = vmatpush1.xpose.msra.mxu0 0.0
    %772 = vmatprep.subr.mxu0 0.0
    %773 = vmatpush1.xpose.msra.mxu0 0.0
    %774 = vmatprep.subr.mxu0 0.0
    %775 = vmatpush1.xpose.msra.mxu0 0.0
    %776 = vmatprep.subr.mxu0 0.0
    %777 = vmatpush1.xpose.msra.mxu0 0.0
    %778 = vmatprep.subr.mxu0 0.0
    %779 = vmatpush1.xpose.msra.mxu0 0.0
    %780 = vmatprep.subr.mxu0 0.0
    %781 = vmatpush1.xpose.msra.mxu0 0.0
    %782 = vmatprep.subr.mxu0 0.0
    %783 = vmatpush1.xpose.msra.mxu0 0.0
    %784 = vmatprep.subr.mxu0 0.0
    %785 = vmatpush1.xpose.msra.mxu0 0.0
    %786 = vmatprep.subr.mxu0 0.0
    %787 = vmatpush1.xpose.msra.mxu0 0.0
    %788 = vmatprep.subr.mxu0 0.0
    %789 = vmatpush1.xpose.msra.mxu0 0.0
    %790 = vmatprep.subr.mxu0 0.0
    %791 = vmatpush1.xpose.msra.mxu0 0.0
    %792 = vmatprep.subr.mxu0 0.0
    %793 = vmatpush1.xpose.msra.mxu0 0.0
    %794 = vmatprep.subr.mxu0 0.0
    %795 = vmatpush1.xpose.msra.mxu0 0.0
    %796 = vmatprep.subr.mxu0 0.0
    %797 = vmatpush1.xpose.msra.mxu0 0.0
    %798 = vmatprep.subr.mxu0 0.0
    %799 = vmatpush1.xpose.msra.mxu0 0.0
    %800 = vmatprep.subr.mxu0 0.0
    %801 = vmatpush1.xpose.msra.mxu0 0.0
    %802 = vmatprep.subr.mxu0 0.0
    %803 = vmatpush1.xpose.msra.mxu0 0.0
    %804 = vmatprep.subr.mxu0 0.0
    %805 = vmatpush1.xpose.msra.mxu0 0.0
    %806 = vmatprep.subr.mxu0 0.0
    %807 = vmatpush1.xpose.msra.mxu0 0.0
    %808 = vmatprep.subr.mxu0 0.0
    %809 = vmatpush1.xpose.msra.mxu0 0.0
    %810 = vmatprep.subr.mxu0 0.0
    %811 = vmatpush1.xpose.msra.mxu0 0.0
    %812 = vmatprep.mubr.f32.mxu0 0.0
    %813 = vmatmul.mubr.f32.gmra.mrb[0].mxu0 %v744
    %v814 = vpop.f32.mrb[0].mxu0
    %v815 = vadd.f32 %v246, %v814
    %v816 = vpop.f32.mrb[0].mxu0
    %817 = vdwg.mxu0
    %v818 = vsel %vm323, %v815, -inf
    %819 = vmax.xlane.f32.xlu0 %v818
    %v820 = vpop.xlane.xlu0 %819
    %v821 = vsub.f32 %v815, %v820
    %v822 = vmul.f32 %v821, 1.442695
    %v823 = vpow.pop %v822
    %v824 = vsel %vm323, %v823, 0.0
    %825 = vadd.xlane.f32.xlu0 %v824
    %v826 = vpop.xlane.xlu0 %825
    %v827 = vrcp.pop %v826
    %v828 = vmul.f32 %v823, %v827
    %829 = vrot.lane.b32.xlu0 %v231, 32
    %v830 = vpop.permute.xlu0 %829
    %v833 = vsel %vm323, %v828, 0
    %835 = vmatprep.subr.mxu0 0.0
    %836 = vmatpush1.msra.mxu0 %v830
    %837 = vmatprep.subr.mxu0 0.0
    %838 = vmatpush1.msra.mxu0 0.0
    %839 = vmatprep.subr.mxu0 0.0
    %840 = vmatpush1.msra.mxu0 0.0
    %841 = vmatprep.subr.mxu0 0.0
    %842 = vmatpush1.msra.mxu0 0.0
    %843 = vmatprep.subr.mxu0 0.0
    %844 = vmatpush1.msra.mxu0 0.0
    %845 = vmatprep.subr.mxu0 0.0
    %846 = vmatpush1.msra.mxu0 0.0
    %847 = vmatprep.subr.mxu0 0.0
    %848 = vmatpush1.msra.mxu0 0.0
    %849 = vmatprep.subr.mxu0 0.0
    %850 = vmatpush1.msra.mxu0 0.0
    %851 = vmatprep.subr.mxu0 0.0
    %852 = vmatpush1.msra.mxu0 0.0
    %853 = vmatprep.subr.mxu0 0.0
    %854 = vmatpush1.msra.mxu0 0.0
    %855 = vmatprep.subr.mxu0 0.0
    %856 = vmatpush1.msra.mxu0 0.0
    %857 = vmatprep.subr.mxu0 0.0
    %858 = vmatpush1.msra.mxu0 0.0
    %859 = vmatprep.subr.mxu0 0.0
    %860 = vmatpush1.msra.mxu0 0.0
    %861 = vmatprep.subr.mxu0 0.0
    %862 = vmatpush1.msra.mxu0 0.0
    %863 = vmatprep.subr.mxu0 0.0
    %864 = vmatpush1.msra.mxu0 0.0
    %865 = vmatprep.subr.mxu0 0.0
    %866 = vmatpush1.msra.mxu0 0.0
    %867 = vmatprep.subr.mxu0 0.0
    %868 = vmatpush1.msra.mxu0 0.0
    %869 = vmatprep.subr.mxu0 0.0
    %870 = vmatpush1.msra.mxu0 0.0
    %871 = vmatprep.subr.mxu0 0.0
    %872 = vmatpush1.msra.mxu0 0.0
    %873 = vmatprep.subr.mxu0 0.0
    %874 = vmatpush1.msra.mxu0 0.0
    %875 = vmatprep.subr.mxu0 0.0
    %876 = vmatpush1.msra.mxu0 0.0
    %877 = vmatprep.subr.mxu0 0.0
    %878 = vmatpush1.msra.mxu0 0.0
    %879 = vmatprep.subr.mxu0 0.0
    %880 = vmatpush1.msra.mxu0 0.0
    %881 = vmatprep.subr.mxu0 0.0
    %882 = vmatpush1.msra.mxu0 0.0
    %883 = vmatprep.subr.mxu0 0.0
    %884 = vmatpush1.msra.mxu0 0.0
    %885 = vmatprep.subr.mxu0 0.0
    %886 = vmatpush1.msra.mxu0 0.0
    %887 = vmatprep.subr.mxu0 0.0
    %888 = vmatpush1.msra.mxu0 0.0
    %889 = vmatprep.subr.mxu0 0.0
    %890 = vmatpush1.msra.mxu0 0.0
    %891 = vmatprep.subr.mxu0 0.0
    %892 = vmatpush1.msra.mxu0 0.0
    %893 = vmatprep.subr.mxu0 0.0
    %894 = vmatpush1.msra.mxu0 0.0
    %895 = vmatprep.subr.mxu0 0.0
    %896 = vmatpush1.msra.mxu0 0.0
    %897 = vmatprep.subr.mxu0 0.0
    %898 = vmatpush1.msra.mxu0 0.0
    %899 = vmatprep.mubr.f32.mxu0 0.0
    %900 = vmatmul.mubr.f32.gmra.mrb[0].mxu0 %v833
    %v901 = vpop.f32.mrb[0].mxu0
    %v902 = vadd.f32 0.0, %v901
    %v903 = vpop.f32.mrb[0].mxu0
    %904 = vdwg.mxu0
    %v905 = vadd.f32 %v739, %v902
    %v907 = vlaneseq
    %v908 = vshrl.u32 %v907, 7
    %v909 = vsub.s32 0, %v908
    %v910 = vrot.slane %v242, %v909
    %v912 = vadd.f32 %v905, %v910
    %v913 = vlaneseq
    %v914 = vshrl.u32 %v913, 7
    %v915 = vsub.s32 1, %v914
    %v916 = vrot.slane %v241, %v915
    %v918 = vsel %vm80, %v160, 0
    %v921 = vsel %vm80, %v162, 0
    %923 = vmatprep.subr.mxu0 0.0
    %924 = vmatpush1.xpose.msra.mxu0 %v921
    %925 = vmatprep.subr.mxu0 0.0
    %926 = vmatpush1.xpose.msra.mxu0 0.0
    %927 = vmatprep.subr.mxu0 0.0
    %928 = vmatpush1.xpose.msra.mxu0 0.0
    %929 = vmatprep.subr.mxu0 0.0
    %930 = vmatpush1.xpose.msra.mxu0 0.0
    %931 = vmatprep.subr.mxu0 0.0
    %932 = vmatpush1.xpose.msra.mxu0 0.0
    %933 = vmatprep.subr.mxu0 0.0
    %934 = vmatpush1.xpose.msra.mxu0 0.0
    %935 = vmatprep.subr.mxu0 0.0
    %936 = vmatpush1.xpose.msra.mxu0 0.0
    %937 = vmatprep.subr.mxu0 0.0
    %938 = vmatpush1.xpose.msra.mxu0 0.0
    %939 = vmatprep.subr.mxu0 0.0
    %940 = vmatpush1.xpose.msra.mxu0 0.0
    %941 = vmatprep.subr.mxu0 0.0
    %942 = vmatpush1.xpose.msra.mxu0 0.0
    %943 = vmatprep.subr.mxu0 0.0
    %944 = vmatpush1.xpose.msra.mxu0 0.0
    %945 = vmatprep.subr.mxu0 0.0
    %946 = vmatpush1.xpose.msra.mxu0 0.0
    %947 = vmatprep.subr.mxu0 0.0
    %948 = vmatpush1.xpose.msra.mxu0 0.0
    %949 = vmatprep.subr.mxu0 0.0
    %950 = vmatpush1.xpose.msra.mxu0 0.0
    %951 = vmatprep.subr.mxu0 0.0
    %952 = vmatpush1.xpose.msra.mxu0 0.0
    %953 = vmatprep.subr.mxu0 0.0
    %954 = vmatpush1.xpose.msra.mxu0 0.0
    %955 = vmatprep.subr.mxu0 0.0
    %956 = vmatpush1.xpose.msra.mxu0 0.0
    %957 = vmatprep.subr.mxu0 0.0
    %958 = vmatpush1.xpose.msra.mxu0 0.0
    %959 = vmatprep.subr.mxu0 0.0
    %960 = vmatpush1.xpose.msra.mxu0 0.0
    %961 = vmatprep.subr.mxu0 0.0
    %962 = vmatpush1.xpose.msra.mxu0 0.0
    %963 = vmatprep.subr.mxu0 0.0
    %964 = vmatpush1.xpose.msra.mxu0 0.0
    %965 = vmatprep.subr.mxu0 0.0
    %966 = vmatpush1.xpose.msra.mxu0 0.0
    %967 = vmatprep.subr.mxu0 0.0
    %968 = vmatpush1.xpose.msra.mxu0 0.0
    %969 = vmatprep.subr.mxu0 0.0
    %970 = vmatpush1.xpose.msra.mxu0 0.0
    %971 = vmatprep.subr.mxu0 0.0
    %972 = vmatpush1.xpose.msra.mxu0 0.0
    %973 = vmatprep.subr.mxu0 0.0
    %974 = vmatpush1.xpose.msra.mxu0 0.0
    %975 = vmatprep.subr.mxu0 0.0
    %976 = vmatpush1.xpose.msra.mxu0 0.0
    %977 = vmatprep.subr.mxu0 0.0
    %978 = vmatpush1.xpose.msra.mxu0 0.0
    %979 = vmatprep.subr.mxu0 0.0
    %980 = vmatpush1.xpose.msra.mxu0 0.0
    %981 = vmatprep.subr.mxu0 0.0
    %982 = vmatpush1.xpose.msra.mxu0 0.0
    %983 = vmatprep.subr.mxu0 0.0
    %984 = vmatpush1.xpose.msra.mxu0 0.0
    %985 = vmatprep.subr.mxu0 0.0
    %986 = vmatpush1.xpose.msra.mxu0 0.0
    %987 = vmatprep.mubr.f32.mxu0 0.0
    %988 = vmatmul.mubr.f32.gmra.mrb[0].mxu0 %v918
    %v989 = vpop.f32.mrb[0].mxu0
    %v990 = vadd.f32 %v916, %v989
    %v991 = vpop.f32.mrb[0].mxu0
    %992 = vdwg.mxu0
    %v993 = vsel %vm323, %v990, -inf
    %994 = vmax.xlane.f32.xlu0 %v993
    %v995 = vpop.xlane.xlu0 %994
    %v996 = vsub.f32 %v990, %v995
    %v997 = vmul.f32 %v996, 1.442695
    %v998 = vpow.pop %v997
    %v999 = vsel %vm323, %v998, 0.0
    %1000 = vadd.xlane.f32.xlu0 %v999
    %v1001 = vpop.xlane.xlu0 %1000
    %v1002 = vrcp.pop %v1001
    %v1003 = vmul.f32 %v998, %v1002
    %1004 = vrot.lane.b32.xlu0 %v160, 96
    %v1005 = vpop.permute.xlu0 %1004
    %1006 = vrot.lane.b32.xlu0 %v162, 96
    %v1007 = vpop.permute.xlu0 %1006
    %v1008 = vsel %vm80, %v1005, 0
    %v1010 = vsel %vm80, %v1007, 0
    %1012 = vmatprep.subr.mxu0 0.0
    %1013 = vmatpush1.xpose.msra.mxu0 %v1010
    %1014 = vmatprep.subr.mxu0 0.0
    %1015 = vmatpush1.xpose.msra.mxu0 0.0
    %1016 = vmatprep.subr.mxu0 0.0
    %1017 = vmatpush1.xpose.msra.mxu0 0.0
    %1018 = vmatprep.subr.mxu0 0.0
    %1019 = vmatpush1.xpose.msra.mxu0 0.0
    %1020 = vmatprep.subr.mxu0 0.0
    %1021 = vmatpush1.xpose.msra.mxu0 0.0
    %1022 = vmatprep.subr.mxu0 0.0
    %1023 = vmatpush1.xpose.msra.mxu0 0.0
    %1024 = vmatprep.subr.mxu0 0.0
    %1025 = vmatpush1.xpose.msra.mxu0 0.0
    %1026 = vmatprep.subr.mxu0 0.0
    %1027 = vmatpush1.xpose.msra.mxu0 0.0
    %1028 = vmatprep.subr.mxu0 0.0
    %1029 = vmatpush1.xpose.msra.mxu0 0.0
    %1030 = vmatprep.subr.mxu0 0.0
    %1031 = vmatpush1.xpose.msra.mxu0 0.0
    %1032 = vmatprep.subr.mxu0 0.0
    %1033 = vmatpush1.xpose.msra.mxu0 0.0
    %1034 = vmatprep.subr.mxu0 0.0
    %1035 = vmatpush1.xpose.msra.mxu0 0.0
    %1036 = vmatprep.subr.mxu0 0.0
    %1037 = vmatpush1.xpose.msra.mxu0 0.0
    %1038 = vmatprep.subr.mxu0 0.0
    %1039 = vmatpush1.xpose.msra.mxu0 0.0
    %1040 = vmatprep.subr.mxu0 0.0
    %1041 = vmatpush1.xpose.msra.mxu0 0.0
    %1042 = vmatprep.subr.mxu0 0.0
    %1043 = vmatpush1.xpose.msra.mxu0 0.0
    %1044 = vmatprep.subr.mxu0 0.0
    %1045 = vmatpush1.xpose.msra.mxu0 0.0
    %1046 = vmatprep.subr.mxu0 0.0
    %1047 = vmatpush1.xpose.msra.mxu0 0.0
    %1048 = vmatprep.subr.mxu0 0.0
    %1049 = vmatpush1.xpose.msra.mxu0 0.0
    %1050 = vmatprep.subr.mxu0 0.0
    %1051 = vmatpush1.xpose.msra.mxu0 0.0
    %1052 = vmatprep.subr.mxu0 0.0
    %1053 = vmatpush1.xpose.msra.mxu0 0.0
    %1054 = vmatprep.subr.mxu0 0.0
    %1055 = vmatpush1.xpose.msra.mxu0 0.0
    %1056 = vmatprep.subr.mxu0 0.0
    %1057 = vmatpush1.xpose.msra.mxu0 0.0
    %1058 = vmatprep.subr.mxu0 0.0
    %1059 = vmatpush1.xpose.msra.mxu0 0.0
    %1060 = vmatprep.subr.mxu0 0.0
    %1061 = vmatpush1.xpose.msra.mxu0 0.0
    %1062 = vmatprep.subr.mxu0 0.0
    %1063 = vmatpush1.xpose.msra.mxu0 0.0
    %1064 = vmatprep.subr.mxu0 0.0
    %1065 = vmatpush1.xpose.msra.mxu0 0.0
    %1066 = vmatprep.subr.mxu0 0.0
    %1067 = vmatpush1.xpose.msra.mxu0 0.0
    %1068 = vmatprep.subr.mxu0 0.0
    %1069 = vmatpush1.xpose.msra.mxu0 0.0
    %1070 = vmatprep.subr.mxu0 0.0
    %1071 = vmatpush1.xpose.msra.mxu0 0.0
    %1072 = vmatprep.subr.mxu0 0.0
    %1073 = vmatpush1.xpose.msra.mxu0 0.0
    %1074 = vmatprep.subr.mxu0 0.0
    %1075 = vmatpush1.xpose.msra.mxu0 0.0
    %1076 = vmatprep.mubr.f32.mxu0 0.0
    %1077 = vmatmul.mubr.f32.gmra.mrb[0].mxu0 %v1008
    %v1078 = vpop.f32.mrb[0].mxu0
    %v1079 = vadd.f32 %v916, %v1078
    %v1080 = vpop.f32.mrb[0].mxu0
    %1081 = vdwg.mxu0
    %v1082 = vsel %vm323, %v1079, -inf
    %1083 = vmax.xlane.f32.xlu0 %v1082
    %v1084 = vpop.xlane.xlu0 %1083
    %v1085 = vsub.f32 %v1079, %v1084
    %v1086 = vmul.f32 %v1085, 1.442695
    %v1087 = vpow.pop %v1086
    %v1088 = vsel %vm323, %v1087, 0.0
    %1089 = vadd.xlane.f32.xlu0 %v1088
    %v1090 = vpop.xlane.xlu0 %1089
    %v1091 = vrcp.pop %v1090
    %v1092 = vmul.f32 %v1087, %v1091
    %1094 = vrot.lane.b32.xlu0 %v236, 96
    %v1095 = vpop.permute.xlu0 %1094
    %v1098 = vsel %vm323, %v1092, 0
    %1100 = vmatprep.subr.mxu0 0.0
    %1101 = vmatpush1.msra.mxu0 %v1095
    %1102 = vmatprep.subr.mxu0 0.0
    %1103 = vmatpush1.msra.mxu0 0.0
    %1104 = vmatprep.subr.mxu0 0.0
    %1105 = vmatpush1.msra.mxu0 0.0
    %1106 = vmatprep.subr.mxu0 0.0
    %1107 = vmatpush1.msra.mxu0 0.0
    %1108 = vmatprep.subr.mxu0 0.0
    %1109 = vmatpush1.msra.mxu0 0.0
    %1110 = vmatprep.subr.mxu0 0.0
    %1111 = vmatpush1.msra.mxu0 0.0
    %1112 = vmatprep.subr.mxu0 0.0
    %1113 = vmatpush1.msra.mxu0 0.0
    %1114 = vmatprep.subr.mxu0 0.0
    %1115 = vmatpush1.msra.mxu0 0.0
    %1116 = vmatprep.subr.mxu0 0.0
    %1117 = vmatpush1.msra.mxu0 0.0
    %1118 = vmatprep.subr.mxu0 0.0
    %1119 = vmatpush1.msra.mxu0 0.0
    %1120 = vmatprep.subr.mxu0 0.0
    %1121 = vmatpush1.msra.mxu0 0.0
    %1122 = vmatprep.subr.mxu0 0.0
    %1123 = vmatpush1.msra.mxu0 0.0
    %1124 = vmatprep.subr.mxu0 0.0
    %1125 = vmatpush1.msra.mxu0 0.0
    %1126 = vmatprep.subr.mxu0 0.0
    %1127 = vmatpush1.msra.mxu0 0.0
    %1128 = vmatprep.subr.mxu0 0.0
    %1129 = vmatpush1.msra.mxu0 0.0
    %1130 = vmatprep.subr.mxu0 0.0
    %1131 = vmatpush1.msra.mxu0 0.0
    %1132 = vmatprep.subr.mxu0 0.0
    %1133 = vmatpush1.msra.mxu0 0.0
    %1134 = vmatprep.subr.mxu0 0.0
    %1135 = vmatpush1.msra.mxu0 0.0
    %1136 = vmatprep.subr.mxu0 0.0
    %1137 = vmatpush1.msra.mxu0 0.0
    %1138 = vmatprep.subr.mxu0 0.0
    %1139 = vmatpush1.msra.mxu0 0.0
    %1140 = vmatprep.subr.mxu0 0.0
    %1141 = vmatpush1.msra.mxu0 0.0
    %1142 = vmatprep.subr.mxu0 0.0
    %1143 = vmatpush1.msra.mxu0 0.0
    %1144 = vmatprep.subr.mxu0 0.0
    %1145 = vmatpush1.msra.mxu0 0.0
    %1146 = vmatprep.subr.mxu0 0.0
    %1147 = vmatpush1.msra.mxu0 0.0
    %1148 = vmatprep.subr.mxu0 0.0
    %1149 = vmatpush1.msra.mxu0 0.0
    %1150 = vmatprep.subr.mxu0 0.0
    %1151 = vmatpush1.msra.mxu0 0.0
    %1152 = vmatprep.subr.mxu0 0.0
    %1153 = vmatpush1.msra.mxu0 0.0
    %1154 = vmatprep.subr.mxu0 0.0
    %1155 = vmatpush1.msra.mxu0 0.0
    %1156 = vmatprep.subr.mxu0 0.0
    %1157 = vmatpush1.msra.mxu0 0.0
    %1158 = vmatprep.subr.mxu0 0.0
    %1159 = vmatpush1.msra.mxu0 0.0
    %1160 = vmatprep.subr.mxu0 0.0
    %1161 = vmatpush1.msra.mxu0 0.0
    %1162 = vmatprep.subr.mxu0 0.0
    %1163 = vmatpush1.msra.mxu0 0.0
    %1164 = vmatprep.mubr.f32.mxu0 0.0
    %1165 = vmatmul.mubr.f32.gmra.mrb[0].mxu0 %v1098
    %v1166 = vpop.f32.mrb[0].mxu0
    %v1167 = vadd.f32 0.0, %v1166
    %v1168 = vpop.f32.mrb[0].mxu0
    %1169 = vdwg.mxu0
    %v1171 = vsel %vm323, %v1003, 0
    %1173 = vmatprep.subr.mxu0 0.0
    %1174 = vmatpush1.msra.mxu0 %v236
    %1175 = vmatprep.subr.mxu0 0.0
    %1176 = vmatpush1.msra.mxu0 0.0
    %1177 = vmatprep.subr.mxu0 0.0
    %1178 = vmatpush1.msra.mxu0 0.0
    %1179 = vmatprep.subr.mxu0 0.0
    %1180 = vmatpush1.msra.mxu0 0.0
    %1181 = vmatprep.subr.mxu0 0.0
    %1182 = vmatpush1.msra.mxu0 0.0
    %1183 = vmatprep.subr.mxu0 0.0
    %1184 = vmatpush1.msra.mxu0 0.0
    %1185 = vmatprep.subr.mxu0 0.0
    %1186 = vmatpush1.msra.mxu0 0.0
    %1187 = vmatprep.subr.mxu0 0.0
    %1188 = vmatpush1.msra.mxu0 0.0
    %1189 = vmatprep.subr.mxu0 0.0
    %1190 = vmatpush1.msra.mxu0 0.0
    %1191 = vmatprep.subr.mxu0 0.0
    %1192 = vmatpush1.msra.mxu0 0.0
    %1193 = vmatprep.subr.mxu0 0.0
    %1194 = vmatpush1.msra.mxu0 0.0
    %1195 = vmatprep.subr.mxu0 0.0
    %1196 = vmatpush1.msra.mxu0 0.0
    %1197 = vmatprep.subr.mxu0 0.0
    %1198 = vmatpush1.msra.mxu0 0.0
    %1199 = vmatprep.subr.mxu0 0.0
    %1200 = vmatpush1.msra.mxu0 0.0
    %1201 = vmatprep.subr.mxu0 0.0
    %1202 = vmatpush1.msra.mxu0 0.0
    %1203 = vmatprep.subr.mxu0 0.0
    %1204 = vmatpush1.msra.mxu0 0.0
    %1205 = vmatprep.subr.mxu0 0.0
    %1206 = vmatpush1.msra.mxu0 0.0
    %1207 = vmatprep.subr.mxu0 0.0
    %1208 = vmatpush1.msra.mxu0 0.0
    %1209 = vmatprep.subr.mxu0 0.0
    %1210 = vmatpush1.msra.mxu0 0.0
    %1211 = vmatprep.subr.mxu0 0.0
    %1212 = vmatpush1.msra.mxu0 0.0
    %1213 = vmatprep.subr.mxu0 0.0
    %1214 = vmatpush1.msra.mxu0 0.0
    %1215 = vmatprep.subr.mxu0 0.0
    %1216 = vmatpush1.msra.mxu0 0.0
    %1217 = vmatprep.subr.mxu0 0.0
    %1218 = vmatpush1.msra.mxu0 0.0
    %1219 = vmatprep.subr.mxu0 0.0
    %1220 = vmatpush1.msra.mxu0 0.0
    %1221 = vmatprep.subr.mxu0 0.0
    %1222 = vmatpush1.msra.mxu0 0.0
    %1223 = vmatprep.subr.mxu0 0.0
    %1224 = vmatpush1.msra.mxu0 0.0
    %1225 = vmatprep.subr.mxu0 0.0
    %1226 = vmatpush1.msra.mxu0 0.0
    %1227 = vmatprep.subr.mxu0 0.0
    %1228 = vmatpush1.msra.mxu0 0.0
    %1229 = vmatprep.subr.mxu0 0.0
    %1230 = vmatpush1.msra.mxu0 0.0
    %1231 = vmatprep.subr.mxu0 0.0
    %1232 = vmatpush1.msra.mxu0 0.0
    %1233 = vmatprep.subr.mxu0 0.0
    %1234 = vmatpush1.msra.mxu0 0.0
    %1235 = vmatprep.subr.mxu0 0.0
    %1236 = vmatpush1.msra.mxu0 0.0
    %1237 = vmatprep.mubr.f32.mxu0 0.0
    %1238 = vmatmul.mubr.f32.gmra.mrb[0].mxu0 %v1171
    %v1239 = vpop.f32.mrb[0].mxu0
    %v1240 = vadd.f32 %v1167, %v1239
    %v1241 = vpop.f32.mrb[0].mxu0
    %1242 = vdwg.mxu0
    %1243 = vrot.lane.b32.xlu0 %v160, 64
    %v1244 = vpop.permute.xlu0 %1243
    %1245 = vrot.lane.b32.xlu0 %v162, 64
    %v1246 = vpop.permute.xlu0 %1245
    %v1247 = vsel %vm80, %v1244, 0
    %v1249 = vsel %vm80, %v1246, 0
    %1251 = vmatprep.subr.mxu0 0.0
    %1252 = vmatpush1.xpose.msra.mxu0 %v1249
    %1253 = vmatprep.subr.mxu0 0.0
    %1254 = vmatpush1.xpose.msra.mxu0 0.0
    %1255 = vmatprep.subr.mxu0 0.0
    %1256 = vmatpush1.xpose.msra.mxu0 0.0
    %1257 = vmatprep.subr.mxu0 0.0
    %1258 = vmatpush1.xpose.msra.mxu0 0.0
    %1259 = vmatprep.subr.mxu0 0.0
    %1260 = vmatpush1.xpose.msra.mxu0 0.0
    %1261 = vmatprep.subr.mxu0 0.0
    %1262 = vmatpush1.xpose.msra.mxu0 0.0
    %1263 = vmatprep.subr.mxu0 0.0
    %1264 = vmatpush1.xpose.msra.mxu0 0.0
    %1265 = vmatprep.subr.mxu0 0.0
    %1266 = vmatpush1.xpose.msra.mxu0 0.0
    %1267 = vmatprep.subr.mxu0 0.0
    %1268 = vmatpush1.xpose.msra.mxu0 0.0
    %1269 = vmatprep.subr.mxu0 0.0
    %1270 = vmatpush1.xpose.msra.mxu0 0.0
    %1271 = vmatprep.subr.mxu0 0.0
    %1272 = vmatpush1.xpose.msra.mxu0 0.0
    %1273 = vmatprep.subr.mxu0 0.0
    %1274 = vmatpush1.xpose.msra.mxu0 0.0
    %1275 = vmatprep.subr.mxu0 0.0
    %1276 = vmatpush1.xpose.msra.mxu0 0.0
    %1277 = vmatprep.subr.mxu0 0.0
    %1278 = vmatpush1.xpose.msra.mxu0 0.0
    %1279 = vmatprep.subr.mxu0 0.0
    %1280 = vmatpush1.xpose.msra.mxu0 0.0
    %1281 = vmatprep.subr.mxu0 0.0
    %1282 = vmatpush1.xpose.msra.mxu0 0.0
    %1283 = vmatprep.subr.mxu0 0.0
    %1284 = vmatpush1.xpose.msra.mxu0 0.0
    %1285 = vmatprep.subr.mxu0 0.0
    %1286 = vmatpush1.xpose.msra.mxu0 0.0
    %1287 = vmatprep.subr.mxu0 0.0
    %1288 = vmatpush1.xpose.msra.mxu0 0.0
    %1289 = vmatprep.subr.mxu0 0.0
    %1290 = vmatpush1.xpose.msra.mxu0 0.0
    %1291 = vmatprep.subr.mxu0 0.0
    %1292 = vmatpush1.xpose.msra.mxu0 0.0
    %1293 = vmatprep.subr.mxu0 0.0
    %1294 = vmatpush1.xpose.msra.mxu0 0.0
    %1295 = vmatprep.subr.mxu0 0.0
    %1296 = vmatpush1.xpose.msra.mxu0 0.0
    %1297 = vmatprep.subr.mxu0 0.0
    %1298 = vmatpush1.xpose.msra.mxu0 0.0
    %1299 = vmatprep.subr.mxu0 0.0
    %1300 = vmatpush1.xpose.msra.mxu0 0.0
    %1301 = vmatprep.subr.mxu0 0.0
    %1302 = vmatpush1.xpose.msra.mxu0 0.0
    %1303 = vmatprep.subr.mxu0 0.0
    %1304 = vmatpush1.xpose.msra.mxu0 0.0
    %1305 = vmatprep.subr.mxu0 0.0
    %1306 = vmatpush1.xpose.msra.mxu0 0.0
    %1307 = vmatprep.subr.mxu0 0.0
    %1308 = vmatpush1.xpose.msra.mxu0 0.0
    %1309 = vmatprep.subr.mxu0 0.0
    %1310 = vmatpush1.xpose.msra.mxu0 0.0
    %1311 = vmatprep.subr.mxu0 0.0
    %1312 = vmatpush1.xpose.msra.mxu0 0.0
    %1313 = vmatprep.subr.mxu0 0.0
    %1314 = vmatpush1.xpose.msra.mxu0 0.0
    %1315 = vmatprep.mubr.f32.mxu0 0.0
    %1316 = vmatmul.mubr.f32.gmra.mrb[0].mxu0 %v1247
    %v1317 = vpop.f32.mrb[0].mxu0
    %v1318 = vadd.f32 %v916, %v1317
    %v1319 = vpop.f32.mrb[0].mxu0
    %1320 = vdwg.mxu0
    %v1321 = vsel %vm323, %v1318, -inf
    %1322 = vmax.xlane.f32.xlu0 %v1321
    %v1323 = vpop.xlane.xlu0 %1322
    %v1324 = vsub.f32 %v1318, %v1323
    %v1325 = vmul.f32 %v1324, 1.442695
    %v1326 = vpow.pop %v1325
    %v1327 = vsel %vm323, %v1326, 0.0
    %1328 = vadd.xlane.f32.xlu0 %v1327
    %v1329 = vpop.xlane.xlu0 %1328
    %v1330 = vrcp.pop %v1329
    %v1331 = vmul.f32 %v1326, %v1330
    %1332 = vrot.lane.b32.xlu0 %v236, 64
    %v1333 = vpop.permute.xlu0 %1332
    %v1336 = vsel %vm323, %v1331, 0
    %1338 = vmatprep.subr.mxu0 0.0
    %1339 = vmatpush1.msra.mxu0 %v1333
    %1340 = vmatprep.subr.mxu0 0.0
    %1341 = vmatpush1.msra.mxu0 0.0
    %1342 = vmatprep.subr.mxu0 0.0
    %1343 = vmatpush1.msra.mxu0 0.0
    %1344 = vmatprep.subr.mxu0 0.0
    %1345 = vmatpush1.msra.mxu0 0.0
    %1346 = vmatprep.subr.mxu0 0.0
    %1347 = vmatpush1.msra.mxu0 0.0
    %1348 = vmatprep.subr.mxu0 0.0
    %1349 = vmatpush1.msra.mxu0 0.0
    %1350 = vmatprep.subr.mxu0 0.0
    %1351 = vmatpush1.msra.mxu0 0.0
    %1352 = vmatprep.subr.mxu0 0.0
    %1353 = vmatpush1.msra.mxu0 0.0
    %1354 = vmatprep.subr.mxu0 0.0
    %1355 = vmatpush1.msra.mxu0 0.0
    %1356 = vmatprep.subr.mxu0 0.0
    %1357 = vmatpush1.msra.mxu0 0.0
    %1358 = vmatprep.subr.mxu0 0.0
    %1359 = vmatpush1.msra.mxu0 0.0
    %1360 = vmatprep.subr.mxu0 0.0
    %1361 = vmatpush1.msra.mxu0 0.0
    %1362 = vmatprep.subr.mxu0 0.0
    %1363 = vmatpush1.msra.mxu0 0.0
    %1364 = vmatprep.subr.mxu0 0.0
    %1365 = vmatpush1.msra.mxu0 0.0
    %1366 = vmatprep.subr.mxu0 0.0
    %1367 = vmatpush1.msra.mxu0 0.0
    %1368 = vmatprep.subr.mxu0 0.0
    %1369 = vmatpush1.msra.mxu0 0.0
    %1370 = vmatprep.subr.mxu0 0.0
    %1371 = vmatpush1.msra.mxu0 0.0
    %1372 = vmatprep.subr.mxu0 0.0
    %1373 = vmatpush1.msra.mxu0 0.0
    %1374 = vmatprep.subr.mxu0 0.0
    %1375 = vmatpush1.msra.mxu0 0.0
    %1376 = vmatprep.subr.mxu0 0.0
    %1377 = vmatpush1.msra.mxu0 0.0
    %1378 = vmatprep.subr.mxu0 0.0
    %1379 = vmatpush1.msra.mxu0 0.0
    %1380 = vmatprep.subr.mxu0 0.0
    %1381 = vmatpush1.msra.mxu0 0.0
    %1382 = vmatprep.subr.mxu0 0.0
    %1383 = vmatpush1.msra.mxu0 0.0
    %1384 = vmatprep.subr.mxu0 0.0
    %1385 = vmatpush1.msra.mxu0 0.0
    %1386 = vmatprep.subr.mxu0 0.0
    %1387 = vmatpush1.msra.mxu0 0.0
    %1388 = vmatprep.subr.mxu0 0.0
    %1389 = vmatpush1.msra.mxu0 0.0
    %1390 = vmatprep.subr.mxu0 0.0
    %1391 = vmatpush1.msra.mxu0 0.0
    %1392 = vmatprep.subr.mxu0 0.0
    %1393 = vmatpush1.msra.mxu0 0.0
    %1394 = vmatprep.subr.mxu0 0.0
    %1395 = vmatpush1.msra.mxu0 0.0
    %1396 = vmatprep.subr.mxu0 0.0
    %1397 = vmatpush1.msra.mxu0 0.0
    %1398 = vmatprep.subr.mxu0 0.0
    %1399 = vmatpush1.msra.mxu0 0.0
    %1400 = vmatprep.subr.mxu0 0.0
    %1401 = vmatpush1.msra.mxu0 0.0
    %1402 = vmatprep.mubr.f32.mxu0 0.0
    %1403 = vmatmul.mubr.f32.gmra.mrb[0].mxu0 %v1336
    %v1404 = vpop.f32.mrb[0].mxu0
    %v1405 = vadd.f32 0.0, %v1404
    %v1406 = vpop.f32.mrb[0].mxu0
    %1407 = vdwg.mxu0
    %v1408 = vadd.f32 %v1240, %v1405
    %1409 = vrot.lane.b32.xlu0 %v160, 32
    %v1410 = vpop.permute.xlu0 %1409
    %1411 = vrot.lane.b32.xlu0 %v162, 32
    %v1412 = vpop.permute.xlu0 %1411
    %v1413 = vsel %vm80, %v1410, 0
    %v1415 = vsel %vm80, %v1412, 0
    %1417 = vmatprep.subr.mxu0 0.0
    %1418 = vmatpush1.xpose.msra.mxu0 %v1415
    %1419 = vmatprep.subr.mxu0 0.0
    %1420 = vmatpush1.xpose.msra.mxu0 0.0
    %1421 = vmatprep.subr.mxu0 0.0
    %1422 = vmatpush1.xpose.msra.mxu0 0.0
    %1423 = vmatprep.subr.mxu0 0.0
    %1424 = vmatpush1.xpose.msra.mxu0 0.0
    %1425 = vmatprep.subr.mxu0 0.0
    %1426 = vmatpush1.xpose.msra.mxu0 0.0
    %1427 = vmatprep.subr.mxu0 0.0
    %1428 = vmatpush1.xpose.msra.mxu0 0.0
    %1429 = vmatprep.subr.mxu0 0.0
    %1430 = vmatpush1.xpose.msra.mxu0 0.0
    %1431 = vmatprep.subr.mxu0 0.0
    %1432 = vmatpush1.xpose.msra.mxu0 0.0
    %1433 = vmatprep.subr.mxu0 0.0
    %1434 = vmatpush1.xpose.msra.mxu0 0.0
    %1435 = vmatprep.subr.mxu0 0.0
    %1436 = vmatpush1.xpose.msra.mxu0 0.0
    %1437 = vmatprep.subr.mxu0 0.0
    %1438 = vmatpush1.xpose.msra.mxu0 0.0
    %1439 = vmatprep.subr.mxu0 0.0
    %1440 = vmatpush1.xpose.msra.mxu0 0.0
    %1441 = vmatprep.subr.mxu0 0.0
    %1442 = vmatpush1.xpose.msra.mxu0 0.0
    %1443 = vmatprep.subr.mxu0 0.0
    %1444 = vmatpush1.xpose.msra.mxu0 0.0
    %1445 = vmatprep.subr.mxu0 0.0
    %1446 = vmatpush1.xpose.msra.mxu0 0.0
    %1447 = vmatprep.subr.mxu0 0.0
    %1448 = vmatpush1.xpose.msra.mxu0 0.0
    %1449 = vmatprep.subr.mxu0 0.0
    %1450 = vmatpush1.xpose.msra.mxu0 0.0
    %1451 = vmatprep.subr.mxu0 0.0
    %1452 = vmatpush1.xpose.msra.mxu0 0.0
    %1453 = vmatprep.subr.mxu0 0.0
    %1454 = vmatpush1.xpose.msra.mxu0 0.0
    %1455 = vmatprep.subr.mxu0 0.0
    %1456 = vmatpush1.xpose.msra.mxu0 0.0
    %1457 = vmatprep.subr.mxu0 0.0
    %1458 = vmatpush1.xpose.msra.mxu0 0.0
    %1459 = vmatprep.subr.mxu0 0.0
    %1460 = vmatpush1.xpose.msra.mxu0 0.0
    %1461 = vmatprep.subr.mxu0 0.0
    %1462 = vmatpush1.xpose.msra.mxu0 0.0
    %1463 = vmatprep.subr.mxu0 0.0
    %1464 = vmatpush1.xpose.msra.mxu0 0.0
    %1465 = vmatprep.subr.mxu0 0.0
    %1466 = vmatpush1.xpose.msra.mxu0 0.0
    %1467 = vmatprep.subr.mxu0 0.0
    %1468 = vmatpush1.xpose.msra.mxu0 0.0
    %1469 = vmatprep.subr.mxu0 0.0
    %1470 = vmatpush1.xpose.msra.mxu0 0.0
    %1471 = vmatprep.subr.mxu0 0.0
    %1472 = vmatpush1.xpose.msra.mxu0 0.0
    %1473 = vmatprep.subr.mxu0 0.0
    %1474 = vmatpush1.xpose.msra.mxu0 0.0
    %1475 = vmatprep.subr.mxu0 0.0
    %1476 = vmatpush1.xpose.msra.mxu0 0.0
    %1477 = vmatprep.subr.mxu0 0.0
    %1478 = vmatpush1.xpose.msra.mxu0 0.0
    %1479 = vmatprep.subr.mxu0 0.0
    %1480 = vmatpush1.xpose.msra.mxu0 0.0
    %1481 = vmatprep.mubr.f32.mxu0 0.0
    %1482 = vmatmul.mubr.f32.gmra.mrb[0].mxu0 %v1413
    %v1483 = vpop.f32.mrb[0].mxu0
    %v1484 = vadd.f32 %v916, %v1483
    %v1485 = vpop.f32.mrb[0].mxu0
    %1486 = vdwg.mxu0
    %v1487 = vsel %vm323, %v1484, -inf
    %1488 = vmax.xlane.f32.xlu0 %v1487
    %v1489 = vpop.xlane.xlu0 %1488
    %v1490 = vsub.f32 %v1484, %v1489
    %v1491 = vmul.f32 %v1490, 1.442695
    %v1492 = vpow.pop %v1491
    %v1493 = vsel %vm323, %v1492, 0.0
    %1494 = vadd.xlane.f32.xlu0 %v1493
    %v1495 = vpop.xlane.xlu0 %1494
    %v1496 = vrcp.pop %v1495
    %v1497 = vmul.f32 %v1492, %v1496
    %1498 = vrot.lane.b32.xlu0 %v236, 32
    %v1499 = vpop.permute.xlu0 %1498
    %v1502 = vsel %vm323, %v1497, 0
    %1504 = vmatprep.subr.mxu0 0.0
    %1505 = vmatpush1.msra.mxu0 %v1499
    %1506 = vmatprep.subr.mxu0 0.0
    %1507 = vmatpush1.msra.mxu0 0.0
    %1508 = vmatprep.subr.mxu0 0.0
    %1509 = vmatpush1.msra.mxu0 0.0
    %1510 = vmatprep.subr.mxu0 0.0
    %1511 = vmatpush1.msra.mxu0 0.0
    %1512 = vmatprep.subr.mxu0 0.0
    %1513 = vmatpush1.msra.mxu0 0.0
    %1514 = vmatprep.subr.mxu0 0.0
    %1515 = vmatpush1.msra.mxu0 0.0
    %1516 = vmatprep.subr.mxu0 0.0
    %1517 = vmatpush1.msra.mxu0 0.0
    %1518 = vmatprep.subr.mxu0 0.0
    %1519 = vmatpush1.msra.mxu0 0.0
    %1520 = vmatprep.subr.mxu0 0.0
    %1521 = vmatpush1.msra.mxu0 0.0
    %1522 = vmatprep.subr.mxu0 0.0
    %1523 = vmatpush1.msra.mxu0 0.0
    %1524 = vmatprep.subr.mxu0 0.0
    %1525 = vmatpush1.msra.mxu0 0.0
    %1526 = vmatprep.subr.mxu0 0.0
    %1527 = vmatpush1.msra.mxu0 0.0
    %1528 = vmatprep.subr.mxu0 0.0
    %1529 = vmatpush1.msra.mxu0 0.0
    %1530 = vmatprep.subr.mxu0 0.0
    %1531 = vmatpush1.msra.mxu0 0.0
    %1532 = vmatprep.subr.mxu0 0.0
    %1533 = vmatpush1.msra.mxu0 0.0
    %1534 = vmatprep.subr.mxu0 0.0
    %1535 = vmatpush1.msra.mxu0 0.0
    %1536 = vmatprep.subr.mxu0 0.0
    %1537 = vmatpush1.msra.mxu0 0.0
    %1538 = vmatprep.subr.mxu0 0.0
    %1539 = vmatpush1.msra.mxu0 0.0
    %1540 = vmatprep.subr.mxu0 0.0
    %1541 = vmatpush1.msra.mxu0 0.0
    %1542 = vmatprep.subr.mxu0 0.0
    %1543 = vmatpush1.msra.mxu0 0.0
    %1544 = vmatprep.subr.mxu0 0.0
    %1545 = vmatpush1.msra.mxu0 0.0
    %1546 = vmatprep.subr.mxu0 0.0
    %1547 = vmatpush1.msra.mxu0 0.0
    %1548 = vmatprep.subr.mxu0 0.0
    %1549 = vmatpush1.msra.mxu0 0.0
    %1550 = vmatprep.subr.mxu0 0.0
    %1551 = vmatpush1.msra.mxu0 0.0
    %1552 = vmatprep.subr.mxu0 0.0
    %1553 = vmatpush1.msra.mxu0 0.0
    %1554 = vmatprep.subr.mxu0 0.0
    %1555 = vmatpush1.msra.mxu0 0.0
    %1556 = vmatprep.subr.mxu0 0.0
    %1557 = vmatpush1.msra.mxu0 0.0
    %1558 = vmatprep.subr.mxu0 0.0
    %1559 = vmatpush1.msra.mxu0 0.0
    %1560 = vmatprep.subr.mxu0 0.0
    %1561 = vmatpush1.msra.mxu0 0.0
    %1562 = vmatprep.subr.mxu0 0.0
    %1563 = vmatpush1.msra.mxu0 0.0
    %1564 = vmatprep.subr.mxu0 0.0
    %1565 = vmatpush1.msra.mxu0 0.0
    %1566 = vmatprep.subr.mxu0 0.0
    %1567 = vmatpush1.msra.mxu0 0.0
    %1568 = vmatprep.mubr.f32.mxu0 0.0
    %1569 = vmatmul.mubr.f32.gmra.mrb[0].mxu0 %v1502
    %v1570 = vpop.f32.mrb[0].mxu0
    %v1571 = vadd.f32 0.0, %v1570
    %v1572 = vpop.f32.mrb[0].mxu0
    %1573 = vdwg.mxu0
    %v1574 = vadd.f32 %v1408, %v1571
    %v1575 = vadd.f32 %v1574, %v910
    %1576 = vst.msk [vmem:[#allocation7] sm:$0xff] %vm80, %v912
    %1577 = vst.msk [vmem:[#allocation7 + $0x8] sm:$0xff] %vm80, %v1575
    // Predicated region
    $region30: #{tpu_custom_call.1} parent=1 // pred_check
      _
    $region31: #{tpu_custom_call.1} parent=1 // pred_check_branch
      %1579 = sbr.rel (0) target = $region33
    $region32: #{tpu_custom_call.1} parent=1 // pred_region
      %s1581 = ssub.s32 256, 256
      %1582 = vsyncadd [#allocation4], %s1581
      %s1583 = sshll.u32 [#allocation7], 4
      %s1584 = int_to_ptr.vmem [resolvable:$true] %s1583
      %1589 = dma.vmem_to_hbm [thread:$0]  %s1584, 256, %s5, [#allocation4], 128, 128, 8
    $region33: #{tpu_custom_call.1} parent=1 // pred_fallthru
      _
    // Predicated region
    $region34: #{tpu_custom_call.1} parent=1 // pred_check
      _
    $region35: #{tpu_custom_call.1} parent=1 // pred_check_branch
      %1591 = sbr.rel (0) target = $region37
    $region36: #{tpu_custom_call.1} parent=1 // pred_region
      %1592 = dma.done [#allocation4], 256
    $region37: #{tpu_custom_call.1} parent=1 // pred_fallthru
      _
    %1593 = vsyncpa [#allocation3], 1
    %1594 = vsyncpa [#allocation6], 1
    %1595 = vsyncpa [#allocation4], 1

</llo_original>
